<compile_context>
chip_gen: v6e
topology: v6e:2x2x1
jax: 0.10.0
libtpu: 0.0.40
codegen_flags: <defaults>
</compile_context>

<pallas_src>
import functools

import jax
import jax.numpy as jnp
from jax import lax
from jax.experimental import pallas as pl
from jax.experimental.pallas import tpu as pltpu


_LANE = 128


def _round_up(n, m=_LANE):
    return ((n + m - 1) // m) * m


def _aligned_offsets(widths):
    """128-lane-aligned start offset for each segment, plus padded total."""
    offs, cur = [], 0
    for w in widths:
        offs.append(cur)
        cur += _round_up(w)
    return tuple(offs), cur


def _dyn_contract(w_flat, vec, out_dim, in_dim):
    """Per-sample contraction (B, out*in) x (B, in) -> (B, out), f32.

    Flat layout is row-major (out-major, in-minor), identical to torch
    .view(B, out, in) of the split projection output.
    """
    if out_dim == 1:
        return jnp.sum(w_flat * vec, axis=-1, keepdims=True)
    if in_dim == 1:
        return w_flat * vec  # (B, out) * (B, 1)
    if out_dim * in_dim <= 512:
        # VPU/XLU form: keep batch on sublanes, avoid B tiny padded MXU passes.
        w = w_flat.reshape(w_flat.shape[0], out_dim, in_dim)
        return jnp.sum(w * vec[:, None, :], axis=-1)
    w = w_flat.reshape(w_flat.shape[0], out_dim, in_dim)
    return lax.dot_general(
        w, vec,
        dimension_numbers=(((2,), (1,)), ((0,), (0,))),
        preferred_element_type=jnp.float32)


def _forward_kernel(
    x_ref,
    ws1_ref, bs1_ref, ws2_ref, bs2_ref,        # stem (full residency)
    wm1_ref, bm1_ref, wm2_ref, bm2_ref,        # hyper-MLP stacks (T, ...) resident
    gpw_ref, gpb_ref,                          # fused final projection (T, ...) resident
    wc_ref, bc_ref,                            # classifier (full residency)
    out_ref,
    *,
    num_iterations, num_state_units, num_hidden_units, num_input_dimensions,
    seg_offsets,
):
    T = num_iterations
    S, H, D = num_state_units, num_hidden_units, num_input_dimensions
    HD, SH = H * D, S * H
    o_w1, o_b1, o_w2, o_b2 = seg_offsets

    x = x_ref[...].astype(jnp.float32)

    # --- stem: Linear(D, H) -> Linear(H, S), once per batch tile (f32) ---
    d = jnp.dot(x, ws1_ref[...], preferred_element_type=jnp.float32) + bs1_ref[...]
    d = jnp.dot(d, ws2_ref[...], preferred_element_type=jnp.float32) + bs2_ref[...]

    def body(t, d):
        # --- FunctionGenerator MLP: bf16 x bf16 MXU feeds, f32 accumulation ---
        h = jnp.dot(d.astype(jnp.bfloat16), wm1_ref[t],
                    preferred_element_type=jnp.float32) + bm1_ref[t]
        h = jnp.maximum(h, 0.0)
        h = jnp.dot(h.astype(jnp.bfloat16), wm2_ref[t],
                    preferred_element_type=jnp.float32) + bm2_ref[t]
        h = jnp.maximum(h, 0.0)

        # --- fused final projection; every head segment starts lane-aligned ---
        proj = jnp.dot(h.astype(jnp.bfloat16), gpw_ref[t],
                       preferred_element_type=jnp.float32) + gpb_ref[t]
        w1 = proj[:, o_w1:o_w1 + HD]       # (B, H*D) -> weight1 flat (H, D)
        b1 = proj[:, o_b1:o_b1 + H]        # (B, H)
        w2 = proj[:, o_w2:o_w2 + SH]       # (B, S*H) -> weight2 flat (S, H)
        b2 = proj[:, o_b2:o_b2 + S]        # (B, S)

        # --- DynamicFunction: bmm(weight1, x)+bias1, bmm(weight2, .)+bias2 ---
        hid = _dyn_contract(w1, x, H, D) + b1    # (B, H)
        upd = _dyn_contract(w2, hid, S, H) + b2  # (B, S)
        return d + upd                           # residual state update

    d = lax.fori_loop(0, T, body, d, unroll=(T <= 8))

    # --- classifier: Linear(S, C); single store per batch tile ---
    out_ref[...] = (jnp.dot(d, wc_ref[...], preferred_element_type=jnp.float32)
                    + bc_ref[...]).astype(out_ref.dtype)


def init_params(key, D, C, T, S, H, scale=0.2):
    """Deterministic synthetic parameters (shapes follow the torch module __init__).

    Per-iteration weights are stored bf16; the fused projection's dense column
    layout is [w1 flat (H,D) | b1 (H) | w2 flat (S,H) | b2 (S)] (torch split
    order) — the kernel wrapper lane-aligns it.
    """
    ks = jax.random.split(key, 12)
    TOT = H * D + H + S * H + S

    def nrm(k, shp, dt=jnp.float32):
        return (scale * jax.random.normal(k, shp, dtype=jnp.float32)).astype(dt)

    return dict(
        # stem
        ws1=nrm(ks[0], (D, H)), bs1=nrm(ks[1], (1, H)),
        ws2=nrm(ks[2], (H, S)), bs2=nrm(ks[3], (1, S)),
        # per-iteration FunctionGenerator MLP (stacked along leading T axis)
        wm1=nrm(ks[4], (T, S, 64), jnp.bfloat16), bm1=nrm(ks[5], (T, 1, 64)),
        wm2=nrm(ks[6], (T, 64, 64), jnp.bfloat16), bm2=nrm(ks[7], (T, 1, 64)),
        # fused final projection Linear(64, H*D + H + S*H + S)
        gproj_w=nrm(ks[8], (T, 64, TOT), jnp.bfloat16),
        gproj_b=nrm(ks[9], (T, 1, TOT)),
        # classifier
        wc=nrm(ks[10], (S, C)), bc=nrm(ks[11], (1, C)),
    )


def _pick_batch_tile(B, cap=512):
    """Largest divisor of B under `cap`, preferring >=2 tiles (v7x megacore)."""
    cap = max(1, min(cap, B))
    divs = [d for d in range(1, B + 1) if B % d == 0 and d <= cap]
    best = max(divs)
    multi = [d for d in divs if B // d >= 2]
    if multi and max(multi) >= max(8, best // 4):
        best = max(multi)
    return best


def iterative_query_vector_forward(x, params, *, num_iterations, num_state_units,
                                   num_hidden_units, num_input_dimensions,
                                   num_classes, batch_tile=None):
    B = x.shape[0]
    T, S, H, D, C = (num_iterations, num_state_units, num_hidden_units,
                     num_input_dimensions, num_classes)
    HD, SH = H * D, S * H

    # --- lane-align the fused projection columns (layout plumbing, wrapper side) ---
    widths = (HD, H, SH, S)
    offs, tot_pad = _aligned_offsets(widths)
    gpw = jnp.zeros((T, 64, tot_pad), params["gproj_w"].dtype)
    gpb = jnp.zeros((T, 1, tot_pad), params["gproj_b"].dtype)
    col = 0
    for off, w in zip(offs, widths):
        gpw = gpw.at[:, :, off:off + w].set(params["gproj_w"][:, :, col:col + w])
        gpb = gpb.at[:, :, off:off + w].set(params["gproj_b"][:, :, col:col + w])
        col += w

    weight_args = [
        params["ws1"], params["bs1"], params["ws2"], params["bs2"],
        params["wm1"], params["bm1"], params["wm2"], params["bm2"],
        gpw, gpb,
        params["wc"], params["bc"],
    ]

    resident_bytes = sum(int(a.size) * a.dtype.itemsize for a in weight_args)
    if resident_bytes > 24 * 1024 * 1024:
        # TODO(synk): for very large T * TOT stacks, fall back to streaming the
        # per-t blocks over a T grid axis (BlockSpec (None, ...) + index_map
        # (t, 0, 0)) instead of full VMEM residency (v7x VMEM is only 64 MiB).
        raise ValueError(
            f"per-iteration weight stack ({resident_bytes} bytes) exceeds the "
            "full-VMEM-residency budget; switch to streamed per-t BlockSpecs")

    # --- batch tiling: largest divisor under cap, prefer >=2 tiles ---
    if batch_tile is not None and B % batch_tile == 0:
        TB = batch_tile
    else:
        TB = _pick_batch_tile(B, cap=batch_tile if batch_tile else 512)
    nb = B // TB

    kernel = functools.partial(
        _forward_kernel,
        num_iterations=T, num_state_units=S, num_hidden_units=H,
        num_input_dimensions=D, seg_offsets=offs,
    )

    def resident_spec(arr):
        nd = arr.ndim
        return pl.BlockSpec(arr.shape, lambda b, _nd=nd: (0,) * _nd)

    in_specs = [pl.BlockSpec((TB, D), lambda b: (b, 0))]        # x, per batch tile
    in_specs += [resident_spec(a) for a in weight_args]
    out_specs = pl.BlockSpec((TB, C), lambda b: (b, 0))

    return pl.pallas_call(
        kernel,
        out_shape=jax.ShapeDtypeStruct((B, C), jnp.float32),
        grid_spec=pltpu.PrefetchScalarGridSpec(
            num_scalar_prefetch=0,
            grid=(nb,),                   # batch tiles only; T is an in-kernel loop
            in_specs=in_specs,
            out_specs=out_specs,
        ),
        compiler_params=pltpu.CompilerParams(
            dimension_semantics=("parallel",),   # independent batch tiles (megacore)
        ),
    )(x, *weight_args)


def reference_forward(x, params, *, num_iterations, num_state_units,
                      num_hidden_units, num_input_dimensions):
    """Plain-JAX reference replicating the torch forward pass semantics
    (with the same bf16 weight storage / bf16 activation feed as the kernel)."""
    B = x.shape[0]
    D, S, H = num_input_dimensions, num_state_units, num_hidden_units
    HD, SH = H * D, S * H
    d = x @ params["ws1"] + params["bs1"]
    d = d @ params["ws2"] + params["bs2"]
    for t in range(num_iterations):
        h = jnp.maximum(
            jnp.dot(d.astype(jnp.bfloat16), params["wm1"][t],
                    preferred_element_type=jnp.float32) + params["bm1"][t], 0.0)
        h = jnp.maximum(
            jnp.dot(h.astype(jnp.bfloat16), params["wm2"][t],
                    preferred_element_type=jnp.float32) + params["bm2"][t], 0.0)
        proj = jnp.dot(h.astype(jnp.bfloat16), params["gproj_w"][t],
                       preferred_element_type=jnp.float32) + params["gproj_b"][t]
        w1 = proj[:, 0:HD]
        b1 = proj[:, HD:HD + H]
        w2 = proj[:, HD + H:HD + H + SH]
        b2 = proj[:, HD + H + SH:HD + H + SH + S]
        hid = jnp.einsum("bhd,bd->bh", w1.reshape(B, H, D), x) + b1
        upd = jnp.einsum("bsh,bh->bs", w2.reshape(B, S, H), hid) + b2
        d = upd + d
    return d @ params["wc"] + params["bc"]


if __name__ == "__main__":
    # Small, module-consistent shapes: vector input (B, D); defaults S=4, H=1.
    B, D, C = 16, 16, 4
    T, S, H = 3, 4, 1

    key = jax.random.PRNGKey(0)
    kx, kp = jax.random.split(key)
    x = jax.random.normal(kx, (B, D), dtype=jnp.float32)
    params = init_params(kp, D, C, T, S, H)

    out = iterative_query_vector_forward(
        x, params,
        num_iterations=T, num_state_units=S, num_hidden_units=H,
        num_input_dimensions=D, num_classes=C,
        batch_tile=None,                   # auto: TB=8 -> nb=2 (exercises batch grid)
    )
    out = jax.block_until_ready(out)

    ref = reference_forward(
        x, params,
        num_iterations=T, num_state_units=S, num_hidden_units=H,
        num_input_dimensions=D,
    )

    assert out.shape == (B, C), out.shape
    assert jnp.allclose(out, ref, atol=1e-3, rtol=1e-3), (out, ref)
    print("KERNEL_OK")
</pallas_src>

<mosaic_0001>
module attributes {stable_mosaic.version = 11 : i64} {
  func.func @_forward_kernel(%arg0: i32, %arg1: memref<8x16xf32, #tpu.memory_space<vmem>>, %arg2: memref<16x1xf32, #tpu.memory_space<vmem>>, %arg3: memref<1x1xf32, #tpu.memory_space<vmem>>, %arg4: memref<1x4xf32, #tpu.memory_space<vmem>>, %arg5: memref<1x4xf32, #tpu.memory_space<vmem>>, %arg6: memref<3x4x64xbf16, #tpu.memory_space<vmem>>, %arg7: memref<3x1x64xf32, #tpu.memory_space<vmem>>, %arg8: memref<3x64x64xbf16, #tpu.memory_space<vmem>>, %arg9: memref<3x1x64xf32, #tpu.memory_space<vmem>>, %arg10: memref<3x64x512xbf16, #tpu.memory_space<vmem>>, %arg11: memref<3x1x512xf32, #tpu.memory_space<vmem>>, %arg12: memref<4x4xf32, #tpu.memory_space<vmem>>, %arg13: memref<1x4xf32, #tpu.memory_space<vmem>>, %arg14: memref<8x4xf32, #tpu.memory_space<vmem>>) attributes {dimension_semantics = [#tpu.dimension_semantics<parallel>], iteration_bounds = array<i64: 2>, scalar_prefetch = 0 : i64, scratch_operands = 0 : i64, tpu.core_type = #tpu.core_type<tc>, window_params = [{transform_indices = @transform_0, window_bounds = array<i64: 8, 16>}, {pipeline_mode = #tpu.pipeline_mode<synchronous>, transform_indices = @transform_1, window_bounds = array<i64: 16, 1>}, {pipeline_mode = #tpu.pipeline_mode<synchronous>, transform_indices = @transform_2, window_bounds = array<i64: 1, 1>}, {pipeline_mode = #tpu.pipeline_mode<synchronous>, transform_indices = @transform_3, window_bounds = array<i64: 1, 4>}, {pipeline_mode = #tpu.pipeline_mode<synchronous>, transform_indices = @transform_4, window_bounds = array<i64: 1, 4>}, {pipeline_mode = #tpu.pipeline_mode<synchronous>, transform_indices = @transform_5, window_bounds = array<i64: 3, 4, 64>}, {pipeline_mode = #tpu.pipeline_mode<synchronous>, transform_indices = @transform_6, window_bounds = array<i64: 3, 1, 64>}, {pipeline_mode = #tpu.pipeline_mode<synchronous>, transform_indices = @transform_7, window_bounds = array<i64: 3, 64, 64>}, {pipeline_mode = #tpu.pipeline_mode<synchronous>, transform_indices = @transform_8, window_bounds = array<i64: 3, 1, 64>}, {pipeline_mode = #tpu.pipeline_mode<synchronous>, transform_indices = @transform_9, window_bounds = array<i64: 3, 64, 512>}, {pipeline_mode = #tpu.pipeline_mode<synchronous>, transform_indices = @transform_10, window_bounds = array<i64: 3, 1, 512>}, {pipeline_mode = #tpu.pipeline_mode<synchronous>, transform_indices = @transform_11, window_bounds = array<i64: 4, 4>}, {pipeline_mode = #tpu.pipeline_mode<synchronous>, transform_indices = @transform_12, window_bounds = array<i64: 1, 4>}, {transform_indices = @transform_13, window_bounds = array<i64: 8, 4>}]} {
    %c0 = arith.constant 0 : index
    %c0_0 = arith.constant 0 : index
    %0 = vector.load %arg1[%c0, %c0_0] : memref<8x16xf32, #tpu.memory_space<vmem>>, vector<8x16xf32>
    %c0_1 = arith.constant 0 : index
    %c0_2 = arith.constant 0 : index
    %1 = vector.load %arg2[%c0_1, %c0_2] : memref<16x1xf32, #tpu.memory_space<vmem>>, vector<16x1xf32>
    %cst = arith.constant dense<0.000000e+00> : vector<8x1xf32>
    %2 = tpu.matmul %0, %1, %cst {dimension_numbers = #tpu.dot_dimension_numbers<[1], [0], [0], [1], [0, 0, 1, 1], [], []>} : vector<8x16xf32>, vector<16x1xf32>, vector<8x1xf32> -> vector<8x1xf32>
    %c0_3 = arith.constant 0 : index
    %c0_4 = arith.constant 0 : index
    %3 = vector.load %arg3[%c0_3, %c0_4] : memref<1x1xf32, #tpu.memory_space<vmem>>, vector<1x1xf32>
    %4 = vector.broadcast %3 : vector<1x1xf32> to vector<8x1xf32>
    %5 = arith.addf %2, %4 : vector<8x1xf32>
    %c0_5 = arith.constant 0 : index
    %c0_6 = arith.constant 0 : index
    %6 = vector.load %arg4[%c0_5, %c0_6] : memref<1x4xf32, #tpu.memory_space<vmem>>, vector<1x4xf32>
    %cst_7 = arith.constant dense<0.000000e+00> : vector<8x4xf32>
    %7 = tpu.matmul %5, %6, %cst_7 {dimension_numbers = #tpu.dot_dimension_numbers<[1], [0], [0], [1], [0, 0, 1, 1], [], []>} : vector<8x1xf32>, vector<1x4xf32>, vector<8x4xf32> -> vector<8x4xf32>
    %c0_8 = arith.constant 0 : index
    %c0_9 = arith.constant 0 : index
    %8 = vector.load %arg5[%c0_8, %c0_9] : memref<1x4xf32, #tpu.memory_space<vmem>>, vector<1x4xf32>
    %9 = vector.broadcast %8 : vector<1x4xf32> to vector<8x4xf32>
    %10 = arith.addf %7, %9 : vector<8x4xf32>
    %c0_i32 = arith.constant 0 : i32
    %11 = arith.truncf %10 : vector<8x4xf32> to vector<8x4xbf16>
    %12 = arith.index_cast %c0_i32 : i32 to index
    %c0_10 = arith.constant 0 : index
    %c0_11 = arith.constant 0 : index
    %13 = vector.load %arg6[%12, %c0_10, %c0_11] : memref<3x4x64xbf16, #tpu.memory_space<vmem>>, vector<1x4x64xbf16>
    %14 = vector.shape_cast %13 : vector<1x4x64xbf16> to vector<4x64xbf16>
    %cst_12 = arith.constant dense<0.000000e+00> : vector<8x64xf32>
    %15 = tpu.matmul %11, %14, %cst_12 {dimension_numbers = #tpu.dot_dimension_numbers<[1], [0], [0], [1], [0, 0, 1, 1], [], []>} : vector<8x4xbf16>, vector<4x64xbf16>, vector<8x64xf32> -> vector<8x64xf32>
    %16 = arith.index_cast %c0_i32 : i32 to index
    %c0_13 = arith.constant 0 : index
    %c0_14 = arith.constant 0 : index
    %17 = vector.load %arg7[%16, %c0_13, %c0_14] : memref<3x1x64xf32, #tpu.memory_space<vmem>>, vector<1x1x64xf32>
    %18 = vector.shape_cast %17 : vector<1x1x64xf32> to vector<1x64xf32>
    %19 = vector.broadcast %18 : vector<1x64xf32> to vector<8x64xf32>
    %20 = arith.addf %15, %19 : vector<8x64xf32>
    %cst_15 = arith.constant 0.000000e+00 : f32
    %21 = vector.broadcast %cst_15 : f32 to vector<8x64xf32>
    %22 = arith.maximumf %20, %21 : vector<8x64xf32>
    %23 = arith.truncf %22 : vector<8x64xf32> to vector<8x64xbf16>
    %24 = arith.index_cast %c0_i32 : i32 to index
    %c0_16 = arith.constant 0 : index
    %c0_17 = arith.constant 0 : index
    %25 = vector.load %arg8[%24, %c0_16, %c0_17] : memref<3x64x64xbf16, #tpu.memory_space<vmem>>, vector<1x64x64xbf16>
    %26 = vector.shape_cast %25 : vector<1x64x64xbf16> to vector<64x64xbf16>
    %cst_18 = arith.constant dense<0.000000e+00> : vector<8x64xf32>
    %27 = tpu.matmul %23, %26, %cst_18 {dimension_numbers = #tpu.dot_dimension_numbers<[1], [0], [0], [1], [0, 0, 1, 1], [], []>} : vector<8x64xbf16>, vector<64x64xbf16>, vector<8x64xf32> -> vector<8x64xf32>
    %28 = arith.index_cast %c0_i32 : i32 to index
    %c0_19 = arith.constant 0 : index
    %c0_20 = arith.constant 0 : index
    %29 = vector.load %arg9[%28, %c0_19, %c0_20] : memref<3x1x64xf32, #tpu.memory_space<vmem>>, vector<1x1x64xf32>
    %30 = vector.shape_cast %29 : vector<1x1x64xf32> to vector<1x64xf32>
    %31 = vector.broadcast %30 : vector<1x64xf32> to vector<8x64xf32>
    %32 = arith.addf %27, %31 : vector<8x64xf32>
    %cst_21 = arith.constant 0.000000e+00 : f32
    %33 = vector.broadcast %cst_21 : f32 to vector<8x64xf32>
    %34 = arith.maximumf %32, %33 : vector<8x64xf32>
    %35 = arith.truncf %34 : vector<8x64xf32> to vector<8x64xbf16>
    %36 = arith.index_cast %c0_i32 : i32 to index
    %c0_22 = arith.constant 0 : index
    %c0_23 = arith.constant 0 : index
    %37 = vector.load %arg10[%36, %c0_22, %c0_23] : memref<3x64x512xbf16, #tpu.memory_space<vmem>>, vector<1x64x512xbf16>
    %38 = vector.shape_cast %37 : vector<1x64x512xbf16> to vector<64x512xbf16>
    %cst_24 = arith.constant dense<0.000000e+00> : vector<8x512xf32>
    %39 = tpu.matmul %35, %38, %cst_24 {dimension_numbers = #tpu.dot_dimension_numbers<[1], [0], [0], [1], [0, 0, 1, 1], [], []>} : vector<8x64xbf16>, vector<64x512xbf16>, vector<8x512xf32> -> vector<8x512xf32>
    %40 = arith.index_cast %c0_i32 : i32 to index
    %c0_25 = arith.constant 0 : index
    %c0_26 = arith.constant 0 : index
    %41 = vector.load %arg11[%40, %c0_25, %c0_26] : memref<3x1x512xf32, #tpu.memory_space<vmem>>, vector<1x1x512xf32>
    %42 = vector.shape_cast %41 : vector<1x1x512xf32> to vector<1x512xf32>
    %43 = vector.broadcast %42 : vector<1x512xf32> to vector<8x512xf32>
    %44 = arith.addf %39, %43 : vector<8x512xf32>
    %45 = vector.extract_strided_slice %44 {offsets = [0, 0], sizes = [8, 16], strides = [1, 1]} : vector<8x512xf32> to vector<8x16xf32>
    %46 = vector.extract_strided_slice %44 {offsets = [0, 128], sizes = [8, 1], strides = [1, 1]} : vector<8x512xf32> to vector<8x1xf32>
    %47 = vector.extract_strided_slice %44 {offsets = [0, 256], sizes = [8, 4], strides = [1, 1]} : vector<8x512xf32> to vector<8x4xf32>
    %48 = vector.extract_strided_slice %44 {offsets = [0, 384], sizes = [8, 4], strides = [1, 1]} : vector<8x512xf32> to vector<8x4xf32>
    %49 = arith.mulf %45, %0 : vector<8x16xf32>
    %cst_27 = arith.constant dense<0.000000e+00> : vector<8xf32>
    %50 = vector.multi_reduction <add>, %49, %cst_27 [1] : vector<8x16xf32> to vector<8xf32>
    %51 = vector.shape_cast %50 : vector<8xf32> to vector<8x1xf32>
    %52 = arith.addf %51, %46 : vector<8x1xf32>
    %53 = vector.broadcast %52 : vector<8x1xf32> to vector<8x4xf32>
    %54 = arith.mulf %47, %53 : vector<8x4xf32>
    %55 = arith.addf %54, %48 : vector<8x4xf32>
    %56 = arith.addf %10, %55 : vector<8x4xf32>
    %c1_i32 = arith.constant 1 : i32
    %57 = arith.truncf %56 : vector<8x4xf32> to vector<8x4xbf16>
    %58 = arith.index_cast %c1_i32 : i32 to index
    %c0_28 = arith.constant 0 : index
    %c0_29 = arith.constant 0 : index
    %59 = vector.load %arg6[%58, %c0_28, %c0_29] : memref<3x4x64xbf16, #tpu.memory_space<vmem>>, vector<1x4x64xbf16>
    %60 = vector.shape_cast %59 : vector<1x4x64xbf16> to vector<4x64xbf16>
    %cst_30 = arith.constant dense<0.000000e+00> : vector<8x64xf32>
    %61 = tpu.matmul %57, %60, %cst_30 {dimension_numbers = #tpu.dot_dimension_numbers<[1], [0], [0], [1], [0, 0, 1, 1], [], []>} : vector<8x4xbf16>, vector<4x64xbf16>, vector<8x64xf32> -> vector<8x64xf32>
    %62 = arith.index_cast %c1_i32 : i32 to index
    %c0_31 = arith.constant 0 : index
    %c0_32 = arith.constant 0 : index
    %63 = vector.load %arg7[%62, %c0_31, %c0_32] : memref<3x1x64xf32, #tpu.memory_space<vmem>>, vector<1x1x64xf32>
    %64 = vector.shape_cast %63 : vector<1x1x64xf32> to vector<1x64xf32>
    %65 = vector.broadcast %64 : vector<1x64xf32> to vector<8x64xf32>
    %66 = arith.addf %61, %65 : vector<8x64xf32>
    %cst_33 = arith.constant 0.000000e+00 : f32
    %67 = vector.broadcast %cst_33 : f32 to vector<8x64xf32>
    %68 = arith.maximumf %66, %67 : vector<8x64xf32>
    %69 = arith.truncf %68 : vector<8x64xf32> to vector<8x64xbf16>
    %70 = arith.index_cast %c1_i32 : i32 to index
    %c0_34 = arith.constant 0 : index
    %c0_35 = arith.constant 0 : index
    %71 = vector.load %arg8[%70, %c0_34, %c0_35] : memref<3x64x64xbf16, #tpu.memory_space<vmem>>, vector<1x64x64xbf16>
    %72 = vector.shape_cast %71 : vector<1x64x64xbf16> to vector<64x64xbf16>
    %cst_36 = arith.constant dense<0.000000e+00> : vector<8x64xf32>
    %73 = tpu.matmul %69, %72, %cst_36 {dimension_numbers = #tpu.dot_dimension_numbers<[1], [0], [0], [1], [0, 0, 1, 1], [], []>} : vector<8x64xbf16>, vector<64x64xbf16>, vector<8x64xf32> -> vector<8x64xf32>
    %74 = arith.index_cast %c1_i32 : i32 to index
    %c0_37 = arith.constant 0 : index
    %c0_38 = arith.constant 0 : index
    %75 = vector.load %arg9[%74, %c0_37, %c0_38] : memref<3x1x64xf32, #tpu.memory_space<vmem>>, vector<1x1x64xf32>
    %76 = vector.shape_cast %75 : vector<1x1x64xf32> to vector<1x64xf32>
    %77 = vector.broadcast %76 : vector<1x64xf32> to vector<8x64xf32>
    %78 = arith.addf %73, %77 : vector<8x64xf32>
    %cst_39 = arith.constant 0.000000e+00 : f32
    %79 = vector.broadcast %cst_39 : f32 to vector<8x64xf32>
    %80 = arith.maximumf %78, %79 : vector<8x64xf32>
    %81 = arith.truncf %80 : vector<8x64xf32> to vector<8x64xbf16>
    %82 = arith.index_cast %c1_i32 : i32 to index
    %c0_40 = arith.constant 0 : index
    %c0_41 = arith.constant 0 : index
    %83 = vector.load %arg10[%82, %c0_40, %c0_41] : memref<3x64x512xbf16, #tpu.memory_space<vmem>>, vector<1x64x512xbf16>
    %84 = vector.shape_cast %83 : vector<1x64x512xbf16> to vector<64x512xbf16>
    %cst_42 = arith.constant dense<0.000000e+00> : vector<8x512xf32>
    %85 = tpu.matmul %81, %84, %cst_42 {dimension_numbers = #tpu.dot_dimension_numbers<[1], [0], [0], [1], [0, 0, 1, 1], [], []>} : vector<8x64xbf16>, vector<64x512xbf16>, vector<8x512xf32> -> vector<8x512xf32>
    %86 = arith.index_cast %c1_i32 : i32 to index
    %c0_43 = arith.constant 0 : index
    %c0_44 = arith.constant 0 : index
    %87 = vector.load %arg11[%86, %c0_43, %c0_44] : memref<3x1x512xf32, #tpu.memory_space<vmem>>, vector<1x1x512xf32>
    %88 = vector.shape_cast %87 : vector<1x1x512xf32> to vector<1x512xf32>
    %89 = vector.broadcast %88 : vector<1x512xf32> to vector<8x512xf32>
    %90 = arith.addf %85, %89 : vector<8x512xf32>
    %91 = vector.extract_strided_slice %90 {offsets = [0, 0], sizes = [8, 16], strides = [1, 1]} : vector<8x512xf32> to vector<8x16xf32>
    %92 = vector.extract_strided_slice %90 {offsets = [0, 128], sizes = [8, 1], strides = [1, 1]} : vector<8x512xf32> to vector<8x1xf32>
    %93 = vector.extract_strided_slice %90 {offsets = [0, 256], sizes = [8, 4], strides = [1, 1]} : vector<8x512xf32> to vector<8x4xf32>
    %94 = vector.extract_strided_slice %90 {offsets = [0, 384], sizes = [8, 4], strides = [1, 1]} : vector<8x512xf32> to vector<8x4xf32>
    %95 = arith.mulf %91, %0 : vector<8x16xf32>
    %cst_45 = arith.constant dense<0.000000e+00> : vector<8xf32>
    %96 = vector.multi_reduction <add>, %95, %cst_45 [1] : vector<8x16xf32> to vector<8xf32>
    %97 = vector.shape_cast %96 : vector<8xf32> to vector<8x1xf32>
    %98 = arith.addf %97, %92 : vector<8x1xf32>
    %99 = vector.broadcast %98 : vector<8x1xf32> to vector<8x4xf32>
    %100 = arith.mulf %93, %99 : vector<8x4xf32>
    %101 = arith.addf %100, %94 : vector<8x4xf32>
    %102 = arith.addf %56, %101 : vector<8x4xf32>
    %c2_i32 = arith.constant 2 : i32
    %103 = arith.truncf %102 : vector<8x4xf32> to vector<8x4xbf16>
    %104 = arith.index_cast %c2_i32 : i32 to index
    %c0_46 = arith.constant 0 : index
    %c0_47 = arith.constant 0 : index
    %105 = vector.load %arg6[%104, %c0_46, %c0_47] : memref<3x4x64xbf16, #tpu.memory_space<vmem>>, vector<1x4x64xbf16>
    %106 = vector.shape_cast %105 : vector<1x4x64xbf16> to vector<4x64xbf16>
    %cst_48 = arith.constant dense<0.000000e+00> : vector<8x64xf32>
    %107 = tpu.matmul %103, %106, %cst_48 {dimension_numbers = #tpu.dot_dimension_numbers<[1], [0], [0], [1], [0, 0, 1, 1], [], []>} : vector<8x4xbf16>, vector<4x64xbf16>, vector<8x64xf32> -> vector<8x64xf32>
    %108 = arith.index_cast %c2_i32 : i32 to index
    %c0_49 = arith.constant 0 : index
    %c0_50 = arith.constant 0 : index
    %109 = vector.load %arg7[%108, %c0_49, %c0_50] : memref<3x1x64xf32, #tpu.memory_space<vmem>>, vector<1x1x64xf32>
    %110 = vector.shape_cast %109 : vector<1x1x64xf32> to vector<1x64xf32>
    %111 = vector.broadcast %110 : vector<1x64xf32> to vector<8x64xf32>
    %112 = arith.addf %107, %111 : vector<8x64xf32>
    %cst_51 = arith.constant 0.000000e+00 : f32
    %113 = vector.broadcast %cst_51 : f32 to vector<8x64xf32>
    %114 = arith.maximumf %112, %113 : vector<8x64xf32>
    %115 = arith.truncf %114 : vector<8x64xf32> to vector<8x64xbf16>
    %116 = arith.index_cast %c2_i32 : i32 to index
    %c0_52 = arith.constant 0 : index
    %c0_53 = arith.constant 0 : index
    %117 = vector.load %arg8[%116, %c0_52, %c0_53] : memref<3x64x64xbf16, #tpu.memory_space<vmem>>, vector<1x64x64xbf16>
    %118 = vector.shape_cast %117 : vector<1x64x64xbf16> to vector<64x64xbf16>
    %cst_54 = arith.constant dense<0.000000e+00> : vector<8x64xf32>
    %119 = tpu.matmul %115, %118, %cst_54 {dimension_numbers = #tpu.dot_dimension_numbers<[1], [0], [0], [1], [0, 0, 1, 1], [], []>} : vector<8x64xbf16>, vector<64x64xbf16>, vector<8x64xf32> -> vector<8x64xf32>
    %120 = arith.index_cast %c2_i32 : i32 to index
    %c0_55 = arith.constant 0 : index
    %c0_56 = arith.constant 0 : index
    %121 = vector.load %arg9[%120, %c0_55, %c0_56] : memref<3x1x64xf32, #tpu.memory_space<vmem>>, vector<1x1x64xf32>
    %122 = vector.shape_cast %121 : vector<1x1x64xf32> to vector<1x64xf32>
    %123 = vector.broadcast %122 : vector<1x64xf32> to vector<8x64xf32>
    %124 = arith.addf %119, %123 : vector<8x64xf32>
    %cst_57 = arith.constant 0.000000e+00 : f32
    %125 = vector.broadcast %cst_57 : f32 to vector<8x64xf32>
    %126 = arith.maximumf %124, %125 : vector<8x64xf32>
    %127 = arith.truncf %126 : vector<8x64xf32> to vector<8x64xbf16>
    %128 = arith.index_cast %c2_i32 : i32 to index
    %c0_58 = arith.constant 0 : index
    %c0_59 = arith.constant 0 : index
    %129 = vector.load %arg10[%128, %c0_58, %c0_59] : memref<3x64x512xbf16, #tpu.memory_space<vmem>>, vector<1x64x512xbf16>
    %130 = vector.shape_cast %129 : vector<1x64x512xbf16> to vector<64x512xbf16>
    %cst_60 = arith.constant dense<0.000000e+00> : vector<8x512xf32>
    %131 = tpu.matmul %127, %130, %cst_60 {dimension_numbers = #tpu.dot_dimension_numbers<[1], [0], [0], [1], [0, 0, 1, 1], [], []>} : vector<8x64xbf16>, vector<64x512xbf16>, vector<8x512xf32> -> vector<8x512xf32>
    %132 = arith.index_cast %c2_i32 : i32 to index
    %c0_61 = arith.constant 0 : index
    %c0_62 = arith.constant 0 : index
    %133 = vector.load %arg11[%132, %c0_61, %c0_62] : memref<3x1x512xf32, #tpu.memory_space<vmem>>, vector<1x1x512xf32>
    %134 = vector.shape_cast %133 : vector<1x1x512xf32> to vector<1x512xf32>
    %135 = vector.broadcast %134 : vector<1x512xf32> to vector<8x512xf32>
    %136 = arith.addf %131, %135 : vector<8x512xf32>
    %137 = vector.extract_strided_slice %136 {offsets = [0, 0], sizes = [8, 16], strides = [1, 1]} : vector<8x512xf32> to vector<8x16xf32>
    %138 = vector.extract_strided_slice %136 {offsets = [0, 128], sizes = [8, 1], strides = [1, 1]} : vector<8x512xf32> to vector<8x1xf32>
    %139 = vector.extract_strided_slice %136 {offsets = [0, 256], sizes = [8, 4], strides = [1, 1]} : vector<8x512xf32> to vector<8x4xf32>
    %140 = vector.extract_strided_slice %136 {offsets = [0, 384], sizes = [8, 4], strides = [1, 1]} : vector<8x512xf32> to vector<8x4xf32>
    %141 = arith.mulf %137, %0 : vector<8x16xf32>
    %cst_63 = arith.constant dense<0.000000e+00> : vector<8xf32>
    %142 = vector.multi_reduction <add>, %141, %cst_63 [1] : vector<8x16xf32> to vector<8xf32>
    %143 = vector.shape_cast %142 : vector<8xf32> to vector<8x1xf32>
    %144 = arith.addf %143, %138 : vector<8x1xf32>
    %145 = vector.broadcast %144 : vector<8x1xf32> to vector<8x4xf32>
    %146 = arith.mulf %139, %145 : vector<8x4xf32>
    %147 = arith.addf %146, %140 : vector<8x4xf32>
    %148 = arith.addf %102, %147 : vector<8x4xf32>
    %c3_i32 = arith.constant 3 : i32
    %c0_64 = arith.constant 0 : index
    %c0_65 = arith.constant 0 : index
    %149 = vector.load %arg12[%c0_64, %c0_65] : memref<4x4xf32, #tpu.memory_space<vmem>>, vector<4x4xf32>
    %cst_66 = arith.constant dense<0.000000e+00> : vector<8x4xf32>
    %150 = tpu.matmul %148, %149, %cst_66 {dimension_numbers = #tpu.dot_dimension_numbers<[1], [0], [0], [1], [0, 0, 1, 1], [], []>} : vector<8x4xf32>, vector<4x4xf32>, vector<8x4xf32> -> vector<8x4xf32>
    %c0_67 = arith.constant 0 : index
    %c0_68 = arith.constant 0 : index
    %151 = vector.load %arg13[%c0_67, %c0_68] : memref<1x4xf32, #tpu.memory_space<vmem>>, vector<1x4xf32>
    %152 = vector.broadcast %151 : vector<1x4xf32> to vector<8x4xf32>
    %153 = arith.addf %150, %152 : vector<8x4xf32>
    %c0_69 = arith.constant 0 : index
    %c0_70 = arith.constant 0 : index
    %154 = vector.load %arg14[%c0_69, %c0_70] : memref<8x4xf32, #tpu.memory_space<vmem>>, vector<8x4xf32>
    tpu.vector_store %arg14[%c0_69, %c0_70], %153 {strides = array<i32>} : memref<8x4xf32, #tpu.memory_space<vmem>>, vector<8x4xf32>,
    return
  }
  func.func @transform_0(%arg0: i32) -> (i32, i32) {
    %c0_i32 = arith.constant 0 : i32
    %c0_i32_0 = arith.constant 0 : i32
    return %arg0, %c0_i32 : i32, i32
  }
  func.func @transform_1(%arg0: i32) -> (i32, i32) {
    %c0_i32 = arith.constant 0 : i32
    %c0_i32_0 = arith.constant 0 : i32
    %c0_i32_1 = arith.constant 0 : i32
    return %c0_i32, %c0_i32_0 : i32, i32
  }
  func.func @transform_2(%arg0: i32) -> (i32, i32) {
    %c0_i32 = arith.constant 0 : i32
    %c0_i32_0 = arith.constant 0 : i32
    %c0_i32_1 = arith.constant 0 : i32
    return %c0_i32, %c0_i32_0 : i32, i32
  }
  func.func @transform_3(%arg0: i32) -> (i32, i32) {
    %c0_i32 = arith.constant 0 : i32
    %c0_i32_0 = arith.constant 0 : i32
    %c0_i32_1 = arith.constant 0 : i32
    return %c0_i32, %c0_i32_0 : i32, i32
  }
  func.func @transform_4(%arg0: i32) -> (i32, i32) {
    %c0_i32 = arith.constant 0 : i32
    %c0_i32_0 = arith.constant 0 : i32
    %c0_i32_1 = arith.constant 0 : i32
    return %c0_i32, %c0_i32_0 : i32, i32
  }
  func.func @transform_5(%arg0: i32) -> (i32, i32, i32) {
    %c0_i32 = arith.constant 0 : i32
    %c0_i32_0 = arith.constant 0 : i32
    %c0_i32_1 = arith.constant 0 : i32
    %c0_i32_2 = arith.constant 0 : i32
    return %c0_i32, %c0_i32_0, %c0_i32_1 : i32, i32, i32
  }
  func.func @transform_6(%arg0: i32) -> (i32, i32, i32) {
    %c0_i32 = arith.constant 0 : i32
    %c0_i32_0 = arith.constant 0 : i32
    %c0_i32_1 = arith.constant 0 : i32
    %c0_i32_2 = arith.constant 0 : i32
    return %c0_i32, %c0_i32_0, %c0_i32_1 : i32, i32, i32
  }
  func.func @transform_7(%arg0: i32) -> (i32, i32, i32) {
    %c0_i32 = arith.constant 0 : i32
    %c0_i32_0 = arith.constant 0 : i32
    %c0_i32_1 = arith.constant 0 : i32
    %c0_i32_2 = arith.constant 0 : i32
    return %c0_i32, %c0_i32_0, %c0_i32_1 : i32, i32, i32
  }
  func.func @transform_8(%arg0: i32) -> (i32, i32, i32) {
    %c0_i32 = arith.constant 0 : i32
    %c0_i32_0 = arith.constant 0 : i32
    %c0_i32_1 = arith.constant 0 : i32
    %c0_i32_2 = arith.constant 0 : i32
    return %c0_i32, %c0_i32_0, %c0_i32_1 : i32, i32, i32
  }
  func.func @transform_9(%arg0: i32) -> (i32, i32, i32) {
    %c0_i32 = arith.constant 0 : i32
    %c0_i32_0 = arith.constant 0 : i32
    %c0_i32_1 = arith.constant 0 : i32
    %c0_i32_2 = arith.constant 0 : i32
    return %c0_i32, %c0_i32_0, %c0_i32_1 : i32, i32, i32
  }
  func.func @transform_10(%arg0: i32) -> (i32, i32, i32) {
    %c0_i32 = arith.constant 0 : i32
    %c0_i32_0 = arith.constant 0 : i32
    %c0_i32_1 = arith.constant 0 : i32
    %c0_i32_2 = arith.constant 0 : i32
    return %c0_i32, %c0_i32_0, %c0_i32_1 : i32, i32, i32
  }
  func.func @transform_11(%arg0: i32) -> (i32, i32) {
    %c0_i32 = arith.constant 0 : i32
    %c0_i32_0 = arith.constant 0 : i32
    %c0_i32_1 = arith.constant 0 : i32
    return %c0_i32, %c0_i32_0 : i32, i32
  }
  func.func @transform_12(%arg0: i32) -> (i32, i32) {
    %c0_i32 = arith.constant 0 : i32
    %c0_i32_0 = arith.constant 0 : i32
    %c0_i32_1 = arith.constant 0 : i32
    return %c0_i32, %c0_i32_0 : i32, i32
  }
  func.func @transform_13(%arg0: i32) -> (i32, i32) {
    %c0_i32 = arith.constant 0 : i32
    %c0_i32_0 = arith.constant 0 : i32
    return %arg0, %c0_i32 : i32, i32
  }
}

</mosaic_0001>

<llo_original>
// kernel: tpu_custom_call.1
$region0: #{tpu_custom_call.1}
  #allocation0 [shape = 'u32[]', space=smem, size = 0x4, offset = 0x4, fixed_abs, tag = 'smem constant byte address 0x4 - core index']
  #allocation1 [shape = 'u32[144,128]{1,0:T(1,128)}', space=vmem, size = 0x12000, scoped, tag = 'internal scratch']
  #allocation2 [shape = 'f32[1,1]{1,0:T(1,128)S(1)}', space=vmem, size = 0x200, scoped, tag = 'scoped memory for tpu_custom_call.1']
  %s0 = inlined_call_operand.vmem [shape: f32[16,16], index: 0, kind: input, shape index: {}]
  %s1 = inlined_call_operand.vmem [shape: f32[16,1], index: 1, kind: input, shape index: {}]
  %s2 = inlined_call_operand.<no memory space> [shape: f32[1,1], index: 2, kind: input, shape index: {}]
  %s3 = inlined_call_operand.hbm [shape: f32[1,4], index: 3, kind: input, shape index: {}]
  %s4 = inlined_call_operand.hbm [shape: f32[1,4], index: 4, kind: input, shape index: {}]
  %s5 = inlined_call_operand.hbm [shape: bf16[3,4,64], index: 5, kind: input, shape index: {}]
  %s6 = inlined_call_operand.hbm [shape: f32[3,1,64], index: 6, kind: input, shape index: {}]
  %s7 = inlined_call_operand.hbm [shape: bf16[3,64,64], index: 7, kind: input, shape index: {}]
  %s8 = inlined_call_operand.hbm [shape: f32[3,1,64], index: 8, kind: input, shape index: {}]
  %s9 = inlined_call_operand.hbm [shape: bf16[3,64,512], index: 9, kind: input, shape index: {}]
  %s10 = inlined_call_operand.vmem [shape: f32[3,1,512], index: 10, kind: input, shape index: {}]
  %s11 = inlined_call_operand.vmem [shape: f32[4,4], index: 11, kind: input, shape index: {}]
  %s12 = inlined_call_operand.vmem [shape: f32[1,4], index: 12, kind: input, shape index: {}]
  %s13 = inlined_call_operand.vmem [shape: f32[16,4], index: 13, kind: output, shape index: {}]
  %s14 = sld [smem:[#allocation0]]
  $region113: #{tpu_custom_call.1} parent=0
    _
  %s16 = ssub.s32 1, %s14
  %s17 = scalar_select 0, %s16, %s14
  %v18 = vstv %s2
  %19 = vst [vmem:[#allocation2] sm:$0x1] %v18
  $region1: #{tpu_custom_call.1} parent=0
    #allocation3 [shape = 'u8[512]{0}', space=vmem, size = 0x400, scoped, tag = 'input window, operand 3, single buffered']
    #allocation4 [shape = 's32[2]{0}', space=sflag, size = 0x8, scoped, tag = 'scoped memory for tpu_custom_call.1']
    #allocation5 [shape = 'u8[512]{0}', space=vmem, size = 0x400, scoped, tag = 'input window, operand 4, single buffered']
    #allocation6 [shape = 's32[1]{0}', space=sflag, size = 0x4, scoped, tag = 'scoped memory for tpu_custom_call.1']
    #allocation7 [shape = 'u8[3072]{0}', space=vmem, size = 0xc00, scoped, tag = 'input window, operand 5, single buffered']
    #allocation8 [shape = 'u8[1536]{0}', space=vmem, size = 0x800, scoped, tag = 'input window, operand 6, single buffered']
    #allocation9 [shape = 's32[1]{0}', space=sflag, size = 0x4, scoped, tag = 'scoped memory for tpu_custom_call.1']
    #allocation10 [shape = 'u8[49152]{0}', space=vmem, size = 0xc000, scoped, tag = 'input window, operand 7, single buffered']
    #allocation11 [shape = 'u8[1536]{0}', space=vmem, size = 0x800, scoped, tag = 'input window, operand 8, single buffered']
    #allocation12 [shape = 's32[1]{0}', space=sflag, size = 0x4, scoped, tag = 'scoped memory for tpu_custom_call.1']
    #allocation13 [shape = 'u8[196608]{0}', space=vmem, size = 0x30000, scoped, tag = 'input window, operand 9, single buffered']
    %20 = vsyncpa [#allocation4], 0
    %21 = vsyncpa [#allocation6], 0
    %22 = vsyncpa [#allocation9], 0
    %23 = vsyncpa [#allocation12], 0
    loop: start=0, step=1, limit=4
    $region2: #{tpu_custom_call.1} parent=1 // loop_pre_header
      _
    $region3: #{tpu_custom_call.1} parent=1 // loop_header
      %s25 = sphi 0, %s29
      %p26 = scmp.ge.s32.totalorder %s25, 4
      %s35 = sphi 0, %s37
      %s38 = sphi 0, %s35
      %s39 = sphi 0, %s38
      %s55 = sphi 0, %s39
      %s59 = sphi 0, %s59
      %s61 = sphi 0, %s59
      %s62 = sphi 0, %s61
      %s76 = sphi 0, %s62
      %s80 = sphi 0, %s80
      %s82 = sphi 0, %s80
      %s83 = sphi 0, %s82
      %s97 = sphi 0, %s83
      %s101 = sphi 0, %s101
      %s103 = sphi 0, %s101
      %s104 = sphi 0, %s103
      %s118 = sphi 0, %s104
      %s122 = sphi 0, %s122
      %s124 = sphi 0, %s122
      %s125 = sphi 0, %s124
      %s139 = sphi 0, %s125
      %s143 = sphi 0, %s143
      %s145 = sphi 0, %s143
      %s146 = sphi 0, %s145
      %s160 = sphi 0, %s146
      %s164 = sphi 0, %s164
      %s166 = sphi 0, %s164
      %s167 = sphi 0, %s166
      %s181 = sphi 0, %s167
      %s185 = sphi 0, %s185
      %s187 = sphi 0, %s185
      %s188 = sphi 0, %s187
      %s202 = sphi 0, %s188
      %s206 = sphi 0, %s206
      %s208 = sphi 0, %s206
      %s209 = sphi 0, %s208
      %s223 = sphi 0, %s209
      %s227 = sphi 0, %s227
      %s229 = sphi 0, %s227
      %s230 = sphi 0, %s229
      %s244 = sphi 0, %s230
      %s248 = sphi 0, %s248
      %s250 = sphi 0, %s248
      %s251 = sphi 0, %s250
      %s265 = sphi 0, %s251
      %s269 = sphi 0, %s269
      %s271 = sphi 0, %s269
      %s272 = sphi 0, %s271
      %s286 = sphi 0, %s272
      %s290 = sphi 0, %s290
      %s292 = sphi 0, %s290
      %s293 = sphi 0, %s292
      %s307 = sphi 0, %s293
      %s313 = sphi 0, %s315
      %s316 = sphi 0, %s313
      %s317 = sphi 0, %s316
      %s333 = sphi 0, %s317
    $region4: #{tpu_custom_call.1} parent=1 // loop_header_branch
      %28 = sbr.rel (%p26) target = $region8
    $region5: #{tpu_custom_call.1} parent=1 // loop_body
      %s30 = ssub.s32 %s25, 1
      %s31 = ssub.s32 %s25, 2
      %s32 = sadd.s32 %s25, 1
      %s33 = ssub.s32 %s25, %s32
      %p34 = scmp.eq.s32.totalorder %s33, 0
      %s36 = sadd.s32 %s35, 1
      %s37 = scalar_select %p34, %s35, %s36
      %p40 = pneg %p34
      %p41 = scmp.eq.s32.totalorder %s25, 1
      %p42 = por %p40, %p41
      %p43 = scmp.ne.s32.totalorder %s35, %s38
      %p44 = scmp.eq.s32.totalorder %s25, 0
      %p45 = por %p43, %p44
      %p46 = scmp.ne.s32.totalorder %s35, %s38
      %p47 = scmp.eq.s32.totalorder %s30, 1
      %p48 = por %p46, %p47
      %p49 = scmp.ne.s32.totalorder %s38, %s39
      %p50 = scmp.eq.s32.totalorder %s30, 0
      %p51 = por %p49, %p50
      %p52 = scmp.ne.s32.totalorder %s38, %s39
      %p53 = scmp.eq.s32.totalorder %s31, 1
      %p54 = por %p52, %p53
      %p56 = scmp.ne.s32.totalorder %s39, %s55
      %p57 = scmp.eq.s32.totalorder %s31, 0
      %p58 = por %p56, %p57
      %s60 = sadd.s32 %s59, 1
      %p63 = scmp.eq.s32.totalorder %s25, 1
      %p64 = scmp.ne.s32.totalorder %s59, %s61
      %p65 = scmp.eq.s32.totalorder %s25, 0
      %p66 = por %p64, %p65
      %p67 = scmp.ne.s32.totalorder %s59, %s61
      %p68 = scmp.eq.s32.totalorder %s30, 1
      %p69 = por %p67, %p68
      %p70 = scmp.ne.s32.totalorder %s61, %s62
      %p71 = scmp.eq.s32.totalorder %s30, 0
      %p72 = por %p70, %p71
      %p73 = scmp.ne.s32.totalorder %s61, %s62
      %p74 = scmp.eq.s32.totalorder %s31, 1
      %p75 = por %p73, %p74
      %p77 = scmp.ne.s32.totalorder %s62, %s76
      %p78 = scmp.eq.s32.totalorder %s31, 0
      %p79 = por %p77, %p78
      %s81 = sadd.s32 %s80, 1
      %p84 = scmp.eq.s32.totalorder %s25, 1
      %p85 = scmp.ne.s32.totalorder %s80, %s82
      %p86 = scmp.eq.s32.totalorder %s25, 0
      %p87 = por %p85, %p86
      %p88 = scmp.ne.s32.totalorder %s80, %s82
      %p89 = scmp.eq.s32.totalorder %s30, 1
      %p90 = por %p88, %p89
      %p91 = scmp.ne.s32.totalorder %s82, %s83
      %p92 = scmp.eq.s32.totalorder %s30, 0
      %p93 = por %p91, %p92
      %p94 = scmp.ne.s32.totalorder %s82, %s83
      %p95 = scmp.eq.s32.totalorder %s31, 1
      %p96 = por %p94, %p95
      %p98 = scmp.ne.s32.totalorder %s83, %s97
      %p99 = scmp.eq.s32.totalorder %s31, 0
      %p100 = por %p98, %p99
      %s102 = sadd.s32 %s101, 1
      %p105 = scmp.eq.s32.totalorder %s25, 1
      %p106 = scmp.ne.s32.totalorder %s101, %s103
      %p107 = scmp.eq.s32.totalorder %s25, 0
      %p108 = por %p106, %p107
      %p109 = scmp.ne.s32.totalorder %s101, %s103
      %p110 = scmp.eq.s32.totalorder %s30, 1
      %p111 = por %p109, %p110
      %p112 = scmp.ne.s32.totalorder %s103, %s104
      %p113 = scmp.eq.s32.totalorder %s30, 0
      %p114 = por %p112, %p113
      %p115 = scmp.ne.s32.totalorder %s103, %s104
      %p116 = scmp.eq.s32.totalorder %s31, 1
      %p117 = por %p115, %p116
      %p119 = scmp.ne.s32.totalorder %s104, %s118
      %p120 = scmp.eq.s32.totalorder %s31, 0
      %p121 = por %p119, %p120
      %s123 = sadd.s32 %s122, 1
      %p126 = scmp.eq.s32.totalorder %s25, 1
      %p127 = scmp.ne.s32.totalorder %s122, %s124
      %p128 = scmp.eq.s32.totalorder %s25, 0
      %p129 = por %p127, %p128
      %p130 = scmp.ne.s32.totalorder %s122, %s124
      %p131 = scmp.eq.s32.totalorder %s30, 1
      %p132 = por %p130, %p131
      %p133 = scmp.ne.s32.totalorder %s124, %s125
      %p134 = scmp.eq.s32.totalorder %s30, 0
      %p135 = por %p133, %p134
      %p136 = scmp.ne.s32.totalorder %s124, %s125
      %p137 = scmp.eq.s32.totalorder %s31, 1
      %p138 = por %p136, %p137
      %p140 = scmp.ne.s32.totalorder %s125, %s139
      %p141 = scmp.eq.s32.totalorder %s31, 0
      %p142 = por %p140, %p141
      %s144 = sadd.s32 %s143, 1
      %p147 = scmp.eq.s32.totalorder %s25, 1
      %p148 = scmp.ne.s32.totalorder %s143, %s145
      %p149 = scmp.eq.s32.totalorder %s25, 0
      %p150 = por %p148, %p149
      %p151 = scmp.ne.s32.totalorder %s143, %s145
      %p152 = scmp.eq.s32.totalorder %s30, 1
      %p153 = por %p151, %p152
      %p154 = scmp.ne.s32.totalorder %s145, %s146
      %p155 = scmp.eq.s32.totalorder %s30, 0
      %p156 = por %p154, %p155
      %p157 = scmp.ne.s32.totalorder %s145, %s146
      %p158 = scmp.eq.s32.totalorder %s31, 1
      %p159 = por %p157, %p158
      %p161 = scmp.ne.s32.totalorder %s146, %s160
      %p162 = scmp.eq.s32.totalorder %s31, 0
      %p163 = por %p161, %p162
      %s165 = sadd.s32 %s164, 1
      %p168 = scmp.eq.s32.totalorder %s25, 1
      %p169 = scmp.ne.s32.totalorder %s164, %s166
      %p170 = scmp.eq.s32.totalorder %s25, 0
      %p171 = por %p169, %p170
      %p172 = scmp.ne.s32.totalorder %s164, %s166
      %p173 = scmp.eq.s32.totalorder %s30, 1
      %p174 = por %p172, %p173
      %p175 = scmp.ne.s32.totalorder %s166, %s167
      %p176 = scmp.eq.s32.totalorder %s30, 0
      %p177 = por %p175, %p176
      %p178 = scmp.ne.s32.totalorder %s166, %s167
      %p179 = scmp.eq.s32.totalorder %s31, 1
      %p180 = por %p178, %p179
      %p182 = scmp.ne.s32.totalorder %s167, %s181
      %p183 = scmp.eq.s32.totalorder %s31, 0
      %p184 = por %p182, %p183
      %s186 = sadd.s32 %s185, 1
      %p189 = scmp.eq.s32.totalorder %s25, 1
      %p190 = scmp.ne.s32.totalorder %s185, %s187
      %p191 = scmp.eq.s32.totalorder %s25, 0
      %p192 = por %p190, %p191
      %p193 = scmp.ne.s32.totalorder %s185, %s187
      %p194 = scmp.eq.s32.totalorder %s30, 1
      %p195 = por %p193, %p194
      %p196 = scmp.ne.s32.totalorder %s187, %s188
      %p197 = scmp.eq.s32.totalorder %s30, 0
      %p198 = por %p196, %p197
      %p199 = scmp.ne.s32.totalorder %s187, %s188
      %p200 = scmp.eq.s32.totalorder %s31, 1
      %p201 = por %p199, %p200
      %p203 = scmp.ne.s32.totalorder %s188, %s202
      %p204 = scmp.eq.s32.totalorder %s31, 0
      %p205 = por %p203, %p204
      %s207 = sadd.s32 %s206, 1
      %p210 = scmp.eq.s32.totalorder %s25, 1
      %p211 = scmp.ne.s32.totalorder %s206, %s208
      %p212 = scmp.eq.s32.totalorder %s25, 0
      %p213 = por %p211, %p212
      %p214 = scmp.ne.s32.totalorder %s206, %s208
      %p215 = scmp.eq.s32.totalorder %s30, 1
      %p216 = por %p214, %p215
      %p217 = scmp.ne.s32.totalorder %s208, %s209
      %p218 = scmp.eq.s32.totalorder %s30, 0
      %p219 = por %p217, %p218
      %p220 = scmp.ne.s32.totalorder %s208, %s209
      %p221 = scmp.eq.s32.totalorder %s31, 1
      %p222 = por %p220, %p221
      %p224 = scmp.ne.s32.totalorder %s209, %s223
      %p225 = scmp.eq.s32.totalorder %s31, 0
      %p226 = por %p224, %p225
      %s228 = sadd.s32 %s227, 1
      %p231 = scmp.eq.s32.totalorder %s25, 1
      %p232 = scmp.ne.s32.totalorder %s227, %s229
      %p233 = scmp.eq.s32.totalorder %s25, 0
      %p234 = por %p232, %p233
      %p235 = scmp.ne.s32.totalorder %s227, %s229
      %p236 = scmp.eq.s32.totalorder %s30, 1
      %p237 = por %p235, %p236
      %p238 = scmp.ne.s32.totalorder %s229, %s230
      %p239 = scmp.eq.s32.totalorder %s30, 0
      %p240 = por %p238, %p239
      %p241 = scmp.ne.s32.totalorder %s229, %s230
      %p242 = scmp.eq.s32.totalorder %s31, 1
      %p243 = por %p241, %p242
      %p245 = scmp.ne.s32.totalorder %s230, %s244
      %p246 = scmp.eq.s32.totalorder %s31, 0
      %p247 = por %p245, %p246
      %s249 = sadd.s32 %s248, 1
      %p252 = scmp.eq.s32.totalorder %s25, 1
      %p253 = scmp.ne.s32.totalorder %s248, %s250
      %p254 = scmp.eq.s32.totalorder %s25, 0
      %p255 = por %p253, %p254
      %p256 = scmp.ne.s32.totalorder %s248, %s250
      %p257 = scmp.eq.s32.totalorder %s30, 1
      %p258 = por %p256, %p257
      %p259 = scmp.ne.s32.totalorder %s250, %s251
      %p260 = scmp.eq.s32.totalorder %s30, 0
      %p261 = por %p259, %p260
      %p262 = scmp.ne.s32.totalorder %s250, %s251
      %p263 = scmp.eq.s32.totalorder %s31, 1
      %p264 = por %p262, %p263
      %p266 = scmp.ne.s32.totalorder %s251, %s265
      %p267 = scmp.eq.s32.totalorder %s31, 0
      %p268 = por %p266, %p267
      %s270 = sadd.s32 %s269, 1
      %p273 = scmp.eq.s32.totalorder %s25, 1
      %p274 = scmp.ne.s32.totalorder %s269, %s271
      %p275 = scmp.eq.s32.totalorder %s25, 0
      %p276 = por %p274, %p275
      %p277 = scmp.ne.s32.totalorder %s269, %s271
      %p278 = scmp.eq.s32.totalorder %s30, 1
      %p279 = por %p277, %p278
      %p280 = scmp.ne.s32.totalorder %s271, %s272
      %p281 = scmp.eq.s32.totalorder %s30, 0
      %p282 = por %p280, %p281
      %p283 = scmp.ne.s32.totalorder %s271, %s272
      %p284 = scmp.eq.s32.totalorder %s31, 1
      %p285 = por %p283, %p284
      %p287 = scmp.ne.s32.totalorder %s272, %s286
      %p288 = scmp.eq.s32.totalorder %s31, 0
      %p289 = por %p287, %p288
      %s291 = sadd.s32 %s290, 1
      %p294 = scmp.eq.s32.totalorder %s25, 1
      %p295 = scmp.ne.s32.totalorder %s290, %s292
      %p296 = scmp.eq.s32.totalorder %s25, 0
      %p297 = por %p295, %p296
      %p298 = scmp.ne.s32.totalorder %s290, %s292
      %p299 = scmp.eq.s32.totalorder %s30, 1
      %p300 = por %p298, %p299
      %p301 = scmp.ne.s32.totalorder %s292, %s293
      %p302 = scmp.eq.s32.totalorder %s30, 0
      %p303 = por %p301, %p302
      %p304 = scmp.ne.s32.totalorder %s292, %s293
      %p305 = scmp.eq.s32.totalorder %s31, 1
      %p306 = por %p304, %p305
      %p308 = scmp.ne.s32.totalorder %s293, %s307
      %p309 = scmp.eq.s32.totalorder %s31, 0
      %p310 = por %p308, %p309
      %s311 = ssub.s32 %s25, %s32
      %p312 = scmp.eq.s32.totalorder %s311, 0
      %s314 = sadd.s32 %s313, 1
      %s315 = scalar_select %p312, %s313, %s314
      %p318 = pneg %p312
      %p319 = scmp.eq.s32.totalorder %s25, 1
      %p320 = por %p318, %p319
      %p321 = scmp.ne.s32.totalorder %s313, %s316
      %p322 = scmp.eq.s32.totalorder %s25, 0
      %p323 = por %p321, %p322
      %p324 = scmp.ne.s32.totalorder %s313, %s316
      %p325 = scmp.eq.s32.totalorder %s30, 1
      %p326 = por %p324, %p325
      %p327 = scmp.ne.s32.totalorder %s316, %s317
      %p328 = scmp.eq.s32.totalorder %s30, 0
      %p329 = por %p327, %p328
      %p330 = scmp.ne.s32.totalorder %s316, %s317
      %p331 = scmp.eq.s32.totalorder %s31, 1
      %p332 = por %p330, %p331
      %p334 = scmp.ne.s32.totalorder %s317, %s333
      %p335 = scmp.eq.s32.totalorder %s31, 0
      %p336 = por %p334, %p335
      %p337 = scmp.le.s32.totalorder 1, %s25
      %p338 = scmp.lt.s32.totalorder %s25, 3
      %p339 = pnand %p337, %p338
      %p340 = pneg %p339
      // Predicated region
      $region9: #{tpu_custom_call.1} parent=5 // pred_check
        _
      $region10: #{tpu_custom_call.1} parent=5 // pred_check_branch
        %342 = sbr.rel (%p339) target = $region12
      $region11: #{tpu_custom_call.1} parent=5 // pred_region
        %s343 = ssub.s32 %s25, 1
        // Predicated region
        $region13: #{tpu_custom_call.1} parent=11 // pred_check
          %p344 = pneg %p72
        $region14: #{tpu_custom_call.1} parent=11 // pred_check_branch
          %346 = sbr.rel (%p344) target = $region16
        $region15: #{tpu_custom_call.1} parent=11 // pred_region
          _
        $region16: #{tpu_custom_call.1} parent=11 // pred_fallthru
          _
        // Predicated region
        $region17: #{tpu_custom_call.1} parent=11 // pred_check
          %p347 = pneg %p93
        $region18: #{tpu_custom_call.1} parent=11 // pred_check_branch
          %349 = sbr.rel (%p347) target = $region20
        $region19: #{tpu_custom_call.1} parent=11 // pred_region
          _
        $region20: #{tpu_custom_call.1} parent=11 // pred_fallthru
          _
        // Predicated region
        $region21: #{tpu_custom_call.1} parent=11 // pred_check
          %p350 = pneg %p114
        $region22: #{tpu_custom_call.1} parent=11 // pred_check_branch
          %352 = sbr.rel (%p350) target = $region24
        $region23: #{tpu_custom_call.1} parent=11 // pred_region
          %s354 = ssub.s32 16, 16
          %355 = vsyncadd [#allocation4], %s354
          %s357 = sshll.u32 [#allocation3], 4
          %s358 = int_to_ptr.vmem [resolvable:$true] %s357
          %360 = dma.hbm_to_vmem [thread:$0]  %s3, 16, %s358, [#allocation4]
        $region24: #{tpu_custom_call.1} parent=11 // pred_fallthru
          _
        // Predicated region
        $region25: #{tpu_custom_call.1} parent=11 // pred_check
          %p361 = pneg %p135
        $region26: #{tpu_custom_call.1} parent=11 // pred_check_branch
          %363 = sbr.rel (%p361) target = $region28
        $region27: #{tpu_custom_call.1} parent=11 // pred_region
          %s365 = ssub.s32 16, 16
          %366 = vsyncadd [#allocation6], %s365
          %s368 = sshll.u32 [#allocation5], 4
          %s369 = int_to_ptr.vmem [resolvable:$true] %s368
          %371 = dma.hbm_to_vmem [thread:$0]  %s4, 16, %s369, [#allocation6]
        $region28: #{tpu_custom_call.1} parent=11 // pred_fallthru
          _
        // Predicated region
        $region29: #{tpu_custom_call.1} parent=11 // pred_check
          %p372 = pneg %p156
        $region30: #{tpu_custom_call.1} parent=11 // pred_check_branch
          %374 = sbr.rel (%p372) target = $region32
        $region31: #{tpu_custom_call.1} parent=11 // pred_region
          %s376 = ssub.s32 96, 96
          %377 = vsyncadd [#allocation6], %s376
          %s378 = sshll.u32 [#allocation7], 4
          %s379 = int_to_ptr.vmem [resolvable:$true] %s378
          %384 = dma.hbm_to_vmem [thread:$0]  %s5, 96, %s379, [#allocation6], 32, 32, 2
        $region32: #{tpu_custom_call.1} parent=11 // pred_fallthru
          _
        // Predicated region
        $region33: #{tpu_custom_call.1} parent=11 // pred_check
          %p385 = pneg %p177
        $region34: #{tpu_custom_call.1} parent=11 // pred_check_branch
          %387 = sbr.rel (%p385) target = $region36
        $region35: #{tpu_custom_call.1} parent=11 // pred_region
          %s389 = ssub.s32 48, 48
          %390 = vsyncadd [#allocation9], %s389
          %s391 = sshll.u32 [#allocation8], 4
          %s392 = int_to_ptr.vmem [resolvable:$true] %s391
          %397 = dma.hbm_to_vmem [thread:$0]  %s6, 48, %s392, [#allocation9], 16, 16, 1
        $region36: #{tpu_custom_call.1} parent=11 // pred_fallthru
          _
        // Predicated region
        $region37: #{tpu_custom_call.1} parent=11 // pred_check
          %p398 = pneg %p198
        $region38: #{tpu_custom_call.1} parent=11 // pred_check_branch
          %400 = sbr.rel (%p398) target = $region40
        $region39: #{tpu_custom_call.1} parent=11 // pred_region
          %s402 = ssub.s32 1536, 1536
          %403 = vsyncadd [#allocation9], %s402
          %s404 = sshll.u32 [#allocation10], 4
          %s405 = int_to_ptr.vmem [resolvable:$true] %s404
          %410 = dma.hbm_to_vmem [thread:$0]  %s7, 1536, %s405, [#allocation9], 64, 64, 4
        $region40: #{tpu_custom_call.1} parent=11 // pred_fallthru
          _
        // Predicated region
        $region41: #{tpu_custom_call.1} parent=11 // pred_check
          %p411 = pneg %p219
        $region42: #{tpu_custom_call.1} parent=11 // pred_check_branch
          %413 = sbr.rel (%p411) target = $region44
        $region43: #{tpu_custom_call.1} parent=11 // pred_region
          %s415 = ssub.s32 48, 48
          %416 = vsyncadd [#allocation12], %s415
          %s417 = sshll.u32 [#allocation11], 4
          %s418 = int_to_ptr.vmem [resolvable:$true] %s417
          %423 = dma.hbm_to_vmem [thread:$0]  %s8, 48, %s418, [#allocation12], 16, 16, 1
        $region44: #{tpu_custom_call.1} parent=11 // pred_fallthru
          _
        // Predicated region
        $region45: #{tpu_custom_call.1} parent=11 // pred_check
          %p424 = pneg %p240
        $region46: #{tpu_custom_call.1} parent=11 // pred_check_branch
          %426 = sbr.rel (%p424) target = $region48
        $region47: #{tpu_custom_call.1} parent=11 // pred_region
          %s428 = ssub.s32 6144, 6144
          %429 = vsyncadd [#allocation12], %s428
          %s430 = sshll.u32 [#allocation13], 4
          %s431 = int_to_ptr.vmem [resolvable:$true] %s430
          %436 = dma.hbm_to_vmem [thread:$0]  %s9, 6144, %s431, [#allocation12], 256, 256, 16
        $region48: #{tpu_custom_call.1} parent=11 // pred_fallthru
          _
        // Predicated region
        $region49: #{tpu_custom_call.1} parent=11 // pred_check
          %p437 = pneg %p261
        $region50: #{tpu_custom_call.1} parent=11 // pred_check_branch
          %439 = sbr.rel (%p437) target = $region52
        $region51: #{tpu_custom_call.1} parent=11 // pred_region
          _
        $region52: #{tpu_custom_call.1} parent=11 // pred_fallthru
          _
        // Predicated region
        $region53: #{tpu_custom_call.1} parent=11 // pred_check
          %p440 = pneg %p282
        $region54: #{tpu_custom_call.1} parent=11 // pred_check_branch
          %442 = sbr.rel (%p440) target = $region56
        $region55: #{tpu_custom_call.1} parent=11 // pred_region
          _
        $region56: #{tpu_custom_call.1} parent=11 // pred_fallthru
          _
        // Predicated region
        $region57: #{tpu_custom_call.1} parent=11 // pred_check
          %p443 = pneg %p303
        $region58: #{tpu_custom_call.1} parent=11 // pred_check_branch
          %445 = sbr.rel (%p443) target = $region60
        $region59: #{tpu_custom_call.1} parent=11 // pred_region
          _
        $region60: #{tpu_custom_call.1} parent=11 // pred_fallthru
          _
      $region12: #{tpu_custom_call.1} parent=5 // pred_fallthru
        _
      %p446 = scmp.lt.s32.totalorder %s25, 2
      // Predicated region
      $region61: #{tpu_custom_call.1} parent=5 // pred_check
        %p447 = pneg %p446
      $region62: #{tpu_custom_call.1} parent=5 // pred_check_branch
        %449 = sbr.rel (%p447) target = $region64
      $region63: #{tpu_custom_call.1} parent=5 // pred_region
        // Predicated region
        $region65: #{tpu_custom_call.1} parent=63 // pred_check
          %p450 = pneg %p45
        $region66: #{tpu_custom_call.1} parent=63 // pred_check_branch
          %452 = sbr.rel (%p450) target = $region68
        $region67: #{tpu_custom_call.1} parent=63 // pred_region
          %p453 = scmp.lt.s32.totalorder %s25, 1
          %s454 = scalar_select %p453, %s25, 1
          %s455 = smul.addr %s454, 8
          %s456 = scalar_lea.vmem %s0, %s455
        $region68: #{tpu_custom_call.1} parent=63 // pred_fallthru
          _
      $region64: #{tpu_custom_call.1} parent=5 // pred_fallthru
        _
      %p457 = scmp.le.s32.totalorder 1, %s25
      %p458 = scmp.lt.s32.totalorder %s25, 3
      %p459 = pnand %p457, %p458
      %p460 = pneg %p459
      // Predicated region
      $region69: #{tpu_custom_call.1} parent=5 // pred_check
        _
      $region70: #{tpu_custom_call.1} parent=5 // pred_check_branch
        %462 = sbr.rel (%p459) target = $region72
      $region71: #{tpu_custom_call.1} parent=5 // pred_region
        %s463 = ssub.s32 %s25, 1
        // Predicated region
        $region73: #{tpu_custom_call.1} parent=71 // pred_check
          %p464 = pneg %p114
        $region74: #{tpu_custom_call.1} parent=71 // pred_check_branch
          %466 = sbr.rel (%p464) target = $region76
        $region75: #{tpu_custom_call.1} parent=71 // pred_region
          %467 = dma.done [#allocation4], 16
        $region76: #{tpu_custom_call.1} parent=71 // pred_fallthru
          _
        // Predicated region
        $region77: #{tpu_custom_call.1} parent=71 // pred_check
          %p468 = pneg %p135
        $region78: #{tpu_custom_call.1} parent=71 // pred_check_branch
          %470 = sbr.rel (%p468) target = $region80
        $region79: #{tpu_custom_call.1} parent=71 // pred_region
          %471 = dma.done [#allocation6], 16
        $region80: #{tpu_custom_call.1} parent=71 // pred_fallthru
          _
        // Predicated region
        $region81: #{tpu_custom_call.1} parent=71 // pred_check
          %p472 = pneg %p156
        $region82: #{tpu_custom_call.1} parent=71 // pred_check_branch
          %474 = sbr.rel (%p472) target = $region84
        $region83: #{tpu_custom_call.1} parent=71 // pred_region
          %475 = dma.done [#allocation6], 96
        $region84: #{tpu_custom_call.1} parent=71 // pred_fallthru
          _
        // Predicated region
        $region85: #{tpu_custom_call.1} parent=71 // pred_check
          %p476 = pneg %p177
        $region86: #{tpu_custom_call.1} parent=71 // pred_check_branch
          %478 = sbr.rel (%p476) target = $region88
        $region87: #{tpu_custom_call.1} parent=71 // pred_region
          %479 = dma.done [#allocation9], 48
        $region88: #{tpu_custom_call.1} parent=71 // pred_fallthru
          _
        // Predicated region
        $region89: #{tpu_custom_call.1} parent=71 // pred_check
          %p480 = pneg %p198
        $region90: #{tpu_custom_call.1} parent=71 // pred_check_branch
          %482 = sbr.rel (%p480) target = $region92
        $region91: #{tpu_custom_call.1} parent=71 // pred_region
          %483 = dma.done [#allocation9], 1536
        $region92: #{tpu_custom_call.1} parent=71 // pred_fallthru
          _
        // Predicated region
        $region93: #{tpu_custom_call.1} parent=71 // pred_check
          %p484 = pneg %p219
        $region94: #{tpu_custom_call.1} parent=71 // pred_check_branch
          %486 = sbr.rel (%p484) target = $region96
        $region95: #{tpu_custom_call.1} parent=71 // pred_region
          %487 = dma.done [#allocation12], 48
        $region96: #{tpu_custom_call.1} parent=71 // pred_fallthru
          _
        // Predicated region
        $region97: #{tpu_custom_call.1} parent=71 // pred_check
          %p488 = pneg %p240
        $region98: #{tpu_custom_call.1} parent=71 // pred_check_branch
          %490 = sbr.rel (%p488) target = $region100
        $region99: #{tpu_custom_call.1} parent=71 // pred_region
          %491 = dma.done [#allocation12], 6144
        $region100: #{tpu_custom_call.1} parent=71 // pred_fallthru
          _
        %p492 = scmp.lt.s32.totalorder %s30, 1
        %s493 = scalar_select %p492, %s30, 1
        %s494 = smul.addr %s493, 8
        %s495 = scalar_lea.vmem %s0, %s494
        %p496 = pneg %p51
        %p497 = pneg %p48
        %p498 = pneg %p72
        %p499 = pneg %p69
        %p500 = pneg %p93
        %p501 = pneg %p90
        %p502 = pneg %p114
        %p503 = pneg %p111
        %p504 = pneg %p135
        %p505 = pneg %p132
        %p506 = pneg %p156
        %p507 = pneg %p153
        %p508 = pneg %p177
        %p509 = pneg %p174
        %p510 = pneg %p198
        %p511 = pneg %p195
        %p512 = pneg %p219
        %p513 = pneg %p216
        %p514 = pneg %p240
        %p515 = pneg %p237
        %p516 = pneg %p261
        %p517 = pneg %p258
        %p518 = pneg %p282
        %p519 = pneg %p279
        %p520 = pneg %p303
        %p521 = pneg %p300
        %p522 = pneg %p329
        %p523 = pneg %p326
        %p524 = scmp.lt.s32.totalorder %s30, 1
        %s525 = scalar_select %p524, %s30, 1
        %s526 = smul.addr %s525, 8
        %s527 = scalar_lea.vmem %s13, %s526
        %p528 = scmp.lt.s32.totalorder %s30, 1
        %s529 = scalar_select %p528, %s30, 1
        %s530 = smul.addr %s529, 8
        %s531 = scalar_lea.vmem %s0, %s530
        %p532 = scmp.lt.s32.totalorder %s30, 1
        %s533 = scalar_select %p532, %s30, 1
        %s534 = smul.addr %s533, 8
        %s535 = scalar_lea.vmem %s13, %s534
        %v537 = vld [vmem:[%s531] sm:$0xff]
        %v538 = vld [vmem:[%s1] sm:$0xff]
        %v539 = vld [vmem:[%s1 + $0x8] sm:$0xff]
        %v540 = vld [vmem:[#allocation2] sm:$0x1]
        %v542 = vlaneseq
        %v543 = vshrl.u32 %v542, 7
        %v544 = vsub.s32 0, %v543
        %v545 = vrot.slane %v540, %v544
        %vm547 = vcmask 130048
        %v549 = vsel %vm547, %v537, 0
        %551 = vmatprep.subr.mxu0 0.0
        %552 = vmatpush1.msra.mxu0 0.0
        %553 = vmatprep.subr.mxu0 0.0
        %554 = vmatpush1.msra.mxu0 0.0
        %555 = vmatprep.subr.mxu0 0.0
        %556 = vmatpush1.msra.mxu0 0.0
        %557 = vmatprep.subr.mxu0 0.0
        %558 = vmatpush1.msra.mxu0 0.0
        %559 = vmatprep.subr.mxu0 0.0
        %560 = vmatpush1.msra.mxu0 0.0
        %561 = vmatprep.subr.mxu0 0.0
        %562 = vmatpush1.msra.mxu0 0.0
        %563 = vmatprep.subr.mxu0 0.0
        %564 = vmatpush1.msra.mxu0 0.0
        %565 = vmatprep.subr.mxu0 0.0
        %566 = vmatpush1.msra.mxu0 0.0
        %567 = vmatprep.subr.mxu0 0.0
        %568 = vmatpush1.msra.mxu0 0.0
        %569 = vmatprep.subr.mxu0 0.0
        %570 = vmatpush1.msra.mxu0 0.0
        %571 = vmatprep.subr.mxu0 0.0
        %572 = vmatpush1.msra.mxu0 0.0
        %573 = vmatprep.subr.mxu0 0.0
        %574 = vmatpush1.msra.mxu0 0.0
        %575 = vmatprep.subr.mxu0 0.0
        %576 = vmatpush1.msra.mxu0 0.0
        %577 = vmatprep.subr.mxu0 0.0
        %578 = vmatpush1.msra.mxu0 0.0
        %579 = vmatprep.subr.mxu0 0.0
        %580 = vmatpush1.msra.mxu0 %v539
        %581 = vmatprep.subr.mxu0 0.0
        %582 = vmatpush1.msra.mxu0 %v538
        %583 = vmatprep.subr.mxu0 0.0
        %584 = vmatpush2.msra.mxu0 0.0
        %585 = vmatprep.subr.mxu0 0.0
        %586 = vmatpush2.msra.mxu0 0.0
        %587 = vmatprep.subr.mxu0 0.0
        %588 = vmatpush2.msra.mxu0 0.0
        %589 = vmatprep.subr.mxu0 0.0
        %590 = vmatpush2.msra.mxu0 0.0
        %591 = vmatprep.subr.mxu0 0.0
        %592 = vmatpush2.msra.mxu0 0.0
        %593 = vmatprep.subr.mxu0 0.0
        %594 = vmatpush2.msra.mxu0 0.0
        %595 = vmatprep.subr.mxu0 0.0
        %596 = vmatpush2.msra.mxu0 0.0
        %597 = vmatprep.subr.mxu0 0.0
        %598 = vmatpush2.msra.mxu0 0.0
        %599 = vmatprep.subr.mxu0 0.0
        %600 = vmatpush2.msra.mxu0 0.0
        %601 = vmatprep.subr.mxu0 0.0
        %602 = vmatpush2.msra.mxu0 0.0
        %603 = vmatprep.subr.mxu0 0.0
        %604 = vmatpush2.msra.mxu0 0.0
        %605 = vmatprep.subr.mxu0 0.0
        %606 = vmatpush2.msra.mxu0 0.0
        %607 = vmatprep.subr.mxu0 0.0
        %608 = vmatpush2.msra.mxu0 0.0
        %609 = vmatprep.subr.mxu0 0.0
        %610 = vmatpush2.msra.mxu0 0.0
        %611 = vmatprep.subr.mxu0 0.0
        %612 = vmatpush2.msra.mxu0 0.0
        %613 = vmatprep.subr.mxu0 0.0
        %614 = vmatpush2.msra.mxu0 0.0
        %615 = vmatprep.mubr.f32.mxu0 0.0
        %616 = vmatmul.mubr.f32.gmra.mxu0 %v549
        %v617 = vpop.f32.mrf.mxu0
        %v618 = vadd.f32 %v545, %v617
        %v619 = vpop.f32.mrf.mxu0
        %620 = vdwg.mxu0
        %v621 = vld [vmem:[#allocation3] sm:$0x1]
        %v622 = vld [vmem:[#allocation5] sm:$0x1]
        %v624 = vlaneseq
        %v625 = vshrl.u32 %v624, 7
        %v626 = vsub.s32 0, %v625
        %v627 = vrot.slane %v622, %v626
        %vm629 = vcmask 7168
        %v631 = vsel %vm629, %v618, 0
        %vm633 = vcmask 1040384
        %v635 = vsel %vm633, %v621, 0
        %637 = vmatprep.subr.mxu0 0.0
        %638 = vmatpush1.msra.mxu0 0.0
        %639 = vmatprep.subr.mxu0 0.0
        %640 = vmatpush1.msra.mxu0 0.0
        %641 = vmatprep.subr.mxu0 0.0
        %642 = vmatpush1.msra.mxu0 0.0
        %643 = vmatprep.subr.mxu0 0.0
        %644 = vmatpush1.msra.mxu0 0.0
        %645 = vmatprep.subr.mxu0 0.0
        %646 = vmatpush1.msra.mxu0 0.0
        %647 = vmatprep.subr.mxu0 0.0
        %648 = vmatpush1.msra.mxu0 0.0
        %649 = vmatprep.subr.mxu0 0.0
        %650 = vmatpush1.msra.mxu0 0.0
        %651 = vmatprep.subr.mxu0 0.0
        %652 = vmatpush1.msra.mxu0 0.0
        %653 = vmatprep.subr.mxu0 0.0
        %654 = vmatpush1.msra.mxu0 0.0
        %655 = vmatprep.subr.mxu0 0.0
        %656 = vmatpush1.msra.mxu0 0.0
        %657 = vmatprep.subr.mxu0 0.0
        %658 = vmatpush1.msra.mxu0 0.0
        %659 = vmatprep.subr.mxu0 0.0
        %660 = vmatpush1.msra.mxu0 0.0
        %661 = vmatprep.subr.mxu0 0.0
        %662 = vmatpush1.msra.mxu0 0.0
        %663 = vmatprep.subr.mxu0 0.0
        %664 = vmatpush1.msra.mxu0 0.0
        %665 = vmatprep.subr.mxu0 0.0
        %666 = vmatpush1.msra.mxu0 0.0
        %667 = vmatprep.subr.mxu0 0.0
        %668 = vmatpush1.msra.mxu0 %v635
        %669 = vmatprep.subr.mxu0 0.0
        %670 = vmatpush2.msra.mxu0 0.0
        %671 = vmatprep.subr.mxu0 0.0
        %672 = vmatpush2.msra.mxu0 0.0
        %673 = vmatprep.subr.mxu0 0.0
        %674 = vmatpush2.msra.mxu0 0.0
        %675 = vmatprep.subr.mxu0 0.0
        %676 = vmatpush2.msra.mxu0 0.0
        %677 = vmatprep.subr.mxu0 0.0
        %678 = vmatpush2.msra.mxu0 0.0
        %679 = vmatprep.subr.mxu0 0.0
        %680 = vmatpush2.msra.mxu0 0.0
        %681 = vmatprep.subr.mxu0 0.0
        %682 = vmatpush2.msra.mxu0 0.0
        %683 = vmatprep.subr.mxu0 0.0
        %684 = vmatpush2.msra.mxu0 0.0
        %685 = vmatprep.subr.mxu0 0.0
        %686 = vmatpush2.msra.mxu0 0.0
        %687 = vmatprep.subr.mxu0 0.0
        %688 = vmatpush2.msra.mxu0 0.0
        %689 = vmatprep.subr.mxu0 0.0
        %690 = vmatpush2.msra.mxu0 0.0
        %691 = vmatprep.subr.mxu0 0.0
        %692 = vmatpush2.msra.mxu0 0.0
        %693 = vmatprep.subr.mxu0 0.0
        %694 = vmatpush2.msra.mxu0 0.0
        %695 = vmatprep.subr.mxu0 0.0
        %696 = vmatpush2.msra.mxu0 0.0
        %697 = vmatprep.subr.mxu0 0.0
        %698 = vmatpush2.msra.mxu0 0.0
        %699 = vmatprep.subr.mxu0 0.0
        %700 = vmatpush2.msra.mxu0 0.0
        %701 = vmatprep.mubr.f32.mxu0 0.0
        %702 = vmatmul.mubr.f32.gmra.mxu0 %v631
        %v703 = vpop.f32.mrf.mxu0
        %v704 = vadd.f32 %v627, %v703
        %v705 = vpop.f32.mrf.mxu0
        %706 = vdwg.mxu0
        %v707 = vpack.c.bf16 %v704, %v704
        %v708 = vld [vmem:[#allocation7] sm:$0x3]
        %v709 = vld [vmem:[#allocation8] sm:$0x1]
        %v711 = vlaneseq
        %v712 = vshrl.u32 %v711, 7
        %v713 = vsub.s32 0, %v712
        %v714 = vrot.slane %v709, %v713
        %vm716 = vcmask 31744
        %v718 = vsel %vm716, %v707, 0
        %vm720 = vcmask 1041408
        %v722 = vsel %vm720, %v708, 0
        %724 = vmatprep.subr.bf16.mxu0 0
        %725 = vmatpush1.bf16.msra.mxu0 0
        %726 = vmatprep.subr.bf16.mxu0 0
        %727 = vmatpush1.bf16.msra.mxu0 0
        %728 = vmatprep.subr.bf16.mxu0 0
        %729 = vmatpush1.bf16.msra.mxu0 0
        %730 = vmatprep.subr.bf16.mxu0 0
        %731 = vmatpush1.bf16.msra.mxu0 0
        %732 = vmatprep.subr.bf16.mxu0 0
        %733 = vmatpush1.bf16.msra.mxu0 0
        %734 = vmatprep.subr.bf16.mxu0 0
        %735 = vmatpush1.bf16.msra.mxu0 0
        %736 = vmatprep.subr.bf16.mxu0 0
        %737 = vmatpush1.bf16.msra.mxu0 0
        %738 = vmatprep.subr.bf16.mxu0 0
        %739 = vmatpush1.bf16.msra.mxu0 %v722
        %740 = vmatprep.subr.bf16.mxu0 0
        %741 = vmatpush2.bf16.msra.mxu0 0
        %742 = vmatprep.subr.bf16.mxu0 0
        %743 = vmatpush2.bf16.msra.mxu0 0
        %744 = vmatprep.subr.bf16.mxu0 0
        %745 = vmatpush2.bf16.msra.mxu0 0
        %746 = vmatprep.subr.bf16.mxu0 0
        %747 = vmatpush2.bf16.msra.mxu0 0
        %748 = vmatprep.subr.bf16.mxu0 0
        %749 = vmatpush2.bf16.msra.mxu0 0
        %750 = vmatprep.subr.bf16.mxu0 0
        %751 = vmatpush2.bf16.msra.mxu0 0
        %752 = vmatprep.subr.bf16.mxu0 0
        %753 = vmatpush2.bf16.msra.mxu0 0
        %754 = vmatprep.subr.bf16.mxu0 0
        %755 = vmatpush2.bf16.msra.mxu0 0
        %756 = vmatprep.mubr.bf16.mxu0 0
        %757 = vmatmul.mubr.bf16.gmra.mxu0 %v718
        %v758 = vpop.f32.mrf.mxu0
        %v759 = vadd.f32 %v714, %v758
        %v760 = vpop.f32.mrf.mxu0
        %v761 = vpop.f32.mrf.mxu0
        %v762 = vpop.f32.mrf.mxu0
        %763 = vdwg.mxu0
        %v764 = vmax.f32 %v759, 0.0
        %v765 = vpack.c.bf16 %v764, %v764
        %v766 = vld [vmem:[#allocation10] sm:$0xf]
        %v767 = vld [vmem:[#allocation10 + $0x4] sm:$0xf]
        %v768 = vld [vmem:[#allocation10 + $0x8] sm:$0xf]
        %v769 = vld [vmem:[#allocation10 + $0xc] sm:$0xf]
        %v770 = vld [vmem:[#allocation10 + $0x10] sm:$0xf]
        %v771 = vld [vmem:[#allocation10 + $0x14] sm:$0xf]
        %v772 = vld [vmem:[#allocation10 + $0x18] sm:$0xf]
        %v773 = vld [vmem:[#allocation10 + $0x1c] sm:$0xf]
        %v774 = vld [vmem:[#allocation11] sm:$0x1]
        %v776 = vlaneseq
        %v777 = vshrl.u32 %v776, 7
        %v778 = vsub.s32 0, %v777
        %v779 = vrot.slane %v774, %v778
        %v789 = vunpack.c.l.b16 %v766
        %v790 = vunpack.c.l.b16 %v767
        %v791 = vunpack.c.l.b16 %v768
        %v792 = vunpack.c.l.b16 %v769
        %v793 = vunpack.c.l.b16 %v770
        %v794 = vunpack.c.l.b16 %v771
        %v795 = vunpack.c.l.b16 %v772
        %v796 = vunpack.c.l.b16 %v773
        %v797 = vpack.c.b16 %v790, %v789
        %v798 = vpack.c.b16 %v792, %v791
        %v799 = vpack.c.b16 %v794, %v793
        %v800 = vpack.c.b16 %v796, %v795
        %vm805 = vcmask 523264
        %v807 = vsel %vm805, %v765, 0
        %809 = vmatprep.subr.bf16.mxu0 0
        %810 = vmatpush1.bf16.msra.mxu0 0
        %811 = vmatprep.subr.bf16.mxu0 0
        %812 = vmatpush1.bf16.msra.mxu0 0
        %813 = vmatprep.subr.bf16.mxu0 0
        %814 = vmatpush1.bf16.msra.mxu0 0
        %815 = vmatprep.subr.bf16.mxu0 0
        %816 = vmatpush1.bf16.msra.mxu0 0
        %817 = vmatprep.subr.bf16.mxu0 0
        %818 = vmatpush1.bf16.msra.mxu0 %v800
        %819 = vmatprep.subr.bf16.mxu0 0
        %820 = vmatpush1.bf16.msra.mxu0 %v799
        %821 = vmatprep.subr.bf16.mxu0 0
        %822 = vmatpush1.bf16.msra.mxu0 %v798
        %823 = vmatprep.subr.bf16.mxu0 0
        %824 = vmatpush1.bf16.msra.mxu0 %v797
        %825 = vmatprep.subr.bf16.mxu0 0
        %826 = vmatpush2.bf16.msra.mxu0 0
        %827 = vmatprep.subr.bf16.mxu0 0
        %828 = vmatpush2.bf16.msra.mxu0 0
        %829 = vmatprep.subr.bf16.mxu0 0
        %830 = vmatpush2.bf16.msra.mxu0 0
        %831 = vmatprep.subr.bf16.mxu0 0
        %832 = vmatpush2.bf16.msra.mxu0 0
        %833 = vmatprep.subr.bf16.mxu0 0
        %834 = vmatpush2.bf16.msra.mxu0 0
        %835 = vmatprep.subr.bf16.mxu0 0
        %836 = vmatpush2.bf16.msra.mxu0 0
        %837 = vmatprep.subr.bf16.mxu0 0
        %838 = vmatpush2.bf16.msra.mxu0 0
        %839 = vmatprep.subr.bf16.mxu0 0
        %840 = vmatpush2.bf16.msra.mxu0 0
        %841 = vmatprep.mubr.bf16.mxu0 0
        %842 = vmatmul.mubr.bf16.gmra.mxu0 %v807
        %v843 = vpop.f32.mrf.mxu0
        %v844 = vadd.f32 %v779, %v843
        %v845 = vpop.f32.mrf.mxu0
        %v846 = vpop.f32.mrf.mxu0
        %v847 = vpop.f32.mrf.mxu0
        %848 = vdwg.mxu0
        %v849 = vmax.f32 %v844, 0.0
        %v850 = vpack.c.bf16 %v849, %v849
        %v851 = vld [vmem:[#allocation13] sm:$0xff]
        %v852 = vld [vmem:[#allocation13 + $0x8] sm:$0xff]
        %v853 = vld [vmem:[#allocation13 + $0x10] sm:$0xff]
        %v854 = vld [vmem:[#allocation13 + $0x18] sm:$0xff]
        %v855 = vld [vmem:[#allocation13 + $0x20] sm:$0xff]
        %v856 = vld [vmem:[#allocation13 + $0x28] sm:$0xff]
        %v857 = vld [vmem:[#allocation13 + $0x30] sm:$0xff]
        %v858 = vld [vmem:[#allocation13 + $0x38] sm:$0xff]
        %v859 = vld [vmem:[#allocation13 + $0x40] sm:$0xff]
        %v860 = vld [vmem:[#allocation13 + $0x48] sm:$0xff]
        %v861 = vld [vmem:[#allocation13 + $0x50] sm:$0xff]
        %v862 = vld [vmem:[#allocation13 + $0x58] sm:$0xff]
        %v863 = vld [vmem:[#allocation13 + $0x60] sm:$0xff]
        %v864 = vld [vmem:[#allocation13 + $0x68] sm:$0xff]
        %v865 = vld [vmem:[#allocation13 + $0x70] sm:$0xff]
        %v866 = vld [vmem:[#allocation13 + $0x78] sm:$0xff]
        %v867 = vld [vmem:[%s10] sm:$0xf]
        %v869 = vlaneseq
        %v870 = vshrl.u32 %v869, 7
        %v871 = vsub.s32 0, %v870
        %v872 = vrot.slane %v867, %v871
        %v873 = vlaneseq
        %v874 = vshrl.u32 %v873, 7
        %v875 = vsub.s32 1, %v874
        %v876 = vrot.slane %v867, %v875
        %v877 = vlaneseq
        %v878 = vshrl.u32 %v877, 7
        %v879 = vsub.s32 2, %v878
        %v880 = vrot.slane %v867, %v879
        %v881 = vlaneseq
        %v882 = vshrl.u32 %v881, 7
        %v883 = vsub.s32 3, %v882
        %v884 = vrot.slane %v867, %v883
        %v905 = vunpack.c.l.b16 %v851
        %v906 = vunpack.c.h.b16 %v851
        %v907 = vunpack.c.l.b16 %v852
        %v908 = vunpack.c.h.b16 %v852
        %v909 = vunpack.c.l.b16 %v853
        %v910 = vunpack.c.h.b16 %v853
        %v911 = vunpack.c.l.b16 %v854
        %v912 = vunpack.c.h.b16 %v854
        %v913 = vunpack.c.l.b16 %v855
        %v914 = vunpack.c.h.b16 %v855
        %v915 = vunpack.c.l.b16 %v856
        %v916 = vunpack.c.h.b16 %v856
        %v917 = vunpack.c.l.b16 %v857
        %v918 = vunpack.c.h.b16 %v857
        %v919 = vunpack.c.l.b16 %v858
        %v920 = vunpack.c.h.b16 %v858
        %v921 = vunpack.c.l.b16 %v859
        %v922 = vunpack.c.h.b16 %v859
        %v923 = vunpack.c.l.b16 %v860
        %v924 = vunpack.c.h.b16 %v860
        %v925 = vunpack.c.l.b16 %v861
        %v926 = vunpack.c.h.b16 %v861
        %v927 = vunpack.c.l.b16 %v862
        %v928 = vunpack.c.h.b16 %v862
        %v929 = vunpack.c.l.b16 %v863
        %v930 = vunpack.c.h.b16 %v863
        %v931 = vunpack.c.l.b16 %v864
        %v932 = vunpack.c.h.b16 %v864
        %v933 = vunpack.c.l.b16 %v865
        %v934 = vunpack.c.h.b16 %v865
        %v935 = vunpack.c.l.b16 %v866
        %v936 = vunpack.c.h.b16 %v866
        %v937 = vpack.c.b16 %v909, %v905
        %v938 = vpack.c.b16 %v910, %v906
        %v939 = vpack.c.b16 %v911, %v907
        %v940 = vpack.c.b16 %v912, %v908
        %v941 = vpack.c.b16 %v917, %v913
        %v942 = vpack.c.b16 %v918, %v914
        %v943 = vpack.c.b16 %v919, %v915
        %v944 = vpack.c.b16 %v920, %v916
        %v945 = vpack.c.b16 %v925, %v921
        %v946 = vpack.c.b16 %v926, %v922
        %v947 = vpack.c.b16 %v927, %v923
        %v948 = vpack.c.b16 %v928, %v924
        %v949 = vpack.c.b16 %v933, %v929
        %v950 = vpack.c.b16 %v934, %v930
        %v951 = vpack.c.b16 %v935, %v931
        %v952 = vpack.c.b16 %v936, %v932
        %v970 = vsel %vm805, %v850, 0
        %972 = vmatprep.subr.bf16.mxu0 0
        %973 = vmatpush1.bf16.msra.mxu0 0
        %974 = vmatprep.subr.bf16.mxu0 0
        %975 = vmatpush1.bf16.msra.mxu0 0
        %976 = vmatprep.subr.bf16.mxu0 0
        %977 = vmatpush1.bf16.msra.mxu0 0
        %978 = vmatprep.subr.bf16.mxu0 0
        %979 = vmatpush1.bf16.msra.mxu0 0
        %980 = vmatprep.subr.bf16.mxu0 %v950
        %981 = vmatpush1.bf16.msra.mxu0 %v949
        %982 = vmatprep.subr.bf16.mxu0 %v946
        %983 = vmatpush1.bf16.msra.mxu0 %v945
        %984 = vmatprep.subr.bf16.mxu0 %v942
        %985 = vmatpush1.bf16.msra.mxu0 %v941
        %986 = vmatprep.subr.bf16.mxu0 %v938
        %987 = vmatpush1.bf16.msra.mxu0 %v937
        %988 = vmatprep.subr.bf16.mxu0 0
        %989 = vmatpush2.bf16.msra.mxu0 0
        %990 = vmatprep.subr.bf16.mxu0 0
        %991 = vmatpush2.bf16.msra.mxu0 0
        %992 = vmatprep.subr.bf16.mxu0 0
        %993 = vmatpush2.bf16.msra.mxu0 0
        %994 = vmatprep.subr.bf16.mxu0 0
        %995 = vmatpush2.bf16.msra.mxu0 0
        %996 = vmatprep.subr.bf16.mxu0 0
        %997 = vmatpush2.bf16.msra.mxu0 0
        %998 = vmatprep.subr.bf16.mxu0 0
        %999 = vmatpush2.bf16.msra.mxu0 0
        %1000 = vmatprep.subr.bf16.mxu0 0
        %1001 = vmatpush2.bf16.msra.mxu0 0
        %1002 = vmatprep.subr.bf16.mxu0 0
        %1003 = vmatpush2.bf16.msra.mxu0 0
        %1004 = vmatprep.mubr.bf16.mxu0 0
        %1005 = vmatmul.mubr.bf16.gmra.mxu0 %v970
        %v1006 = vpop.f32.mrf.mxu0
        %v1007 = vadd.f32 %v872, %v1006
        %v1008 = vpop.f32.mrf.mxu0
        %v1009 = vadd.f32 %v876, %v1008
        %v1010 = vpop.f32.mrf.mxu0
        %v1011 = vpop.f32.mrf.mxu0
        %1012 = vdwg.mxu0
        %1013 = vmatprep.subr.bf16.mxu0 0
        %1014 = vmatpush1.bf16.msra.mxu0 0
        %1015 = vmatprep.subr.bf16.mxu0 0
        %1016 = vmatpush1.bf16.msra.mxu0 0
        %1017 = vmatprep.subr.bf16.mxu0 0
        %1018 = vmatpush1.bf16.msra.mxu0 0
        %1019 = vmatprep.subr.bf16.mxu0 0
        %1020 = vmatpush1.bf16.msra.mxu0 0
        %1021 = vmatprep.subr.bf16.mxu0 %v952
        %1022 = vmatpush1.bf16.msra.mxu0 %v951
        %1023 = vmatprep.subr.bf16.mxu0 %v948
        %1024 = vmatpush1.bf16.msra.mxu0 %v947
        %1025 = vmatprep.subr.bf16.mxu0 %v944
        %1026 = vmatpush1.bf16.msra.mxu0 %v943
        %1027 = vmatprep.subr.bf16.mxu0 %v940
        %1028 = vmatpush1.bf16.msra.mxu0 %v939
        %1029 = vmatprep.subr.bf16.mxu0 0
        %1030 = vmatpush2.bf16.msra.mxu0 0
        %1031 = vmatprep.subr.bf16.mxu0 0
        %1032 = vmatpush2.bf16.msra.mxu0 0
        %1033 = vmatprep.subr.bf16.mxu0 0
        %1034 = vmatpush2.bf16.msra.mxu0 0
        %1035 = vmatprep.subr.bf16.mxu0 0
        %1036 = vmatpush2.bf16.msra.mxu0 0
        %1037 = vmatprep.subr.bf16.mxu0 0
        %1038 = vmatpush2.bf16.msra.mxu0 0
        %1039 = vmatprep.subr.bf16.mxu0 0
        %1040 = vmatpush2.bf16.msra.mxu0 0
        %1041 = vmatprep.subr.bf16.mxu0 0
        %1042 = vmatpush2.bf16.msra.mxu0 0
        %1043 = vmatprep.subr.bf16.mxu0 0
        %1044 = vmatpush2.bf16.msra.mxu0 0
        %1045 = vmatprep.mubr.bf16.mxu0 0
        %1046 = vmatmul.mubr.bf16.gmra.mxu0 %v970
        %v1047 = vpop.f32.mrf.mxu0
        %v1048 = vadd.f32 %v880, %v1047
        %v1049 = vpop.f32.mrf.mxu0
        %v1050 = vadd.f32 %v884, %v1049
        %v1051 = vpop.f32.mrf.mxu0
        %v1052 = vpop.f32.mrf.mxu0
        %1053 = vdwg.mxu0
        %v1054 = vmul.f32 %v1007, %v537
        %v1055 = vsel %vm547, %v1054, 0.0
        %1056 = vadd.xlane.f32.xlu0 %v1055
        %v1057 = vpop.xlane.xlu0 %1056
        %v1058 = vadd.f32 %v1057, %v1009
        %1060 = vset.pattern.permute.xlu0 0
        %1061 = vperm.xlu0 %1060, %v1058
        %v1062 = vpop.permute.xlu0 %1061
        %v1064 = vmul.f32 %v1048, %v1062
        %v1065 = vadd.f32 %v1064, %v1050
        %v1066 = vadd.f32 %v704, %v1065
        %v1067 = vpack.c.bf16 %v1066, %v1066
        %s1068 = scalar_lea.vmem [#allocation7], 2
        %v1069 = vld [vmem:[%s1068] sm:$0x3]
        %s1070 = scalar_lea.vmem [#allocation8], 1
        %v1071 = vld [vmem:[%s1070] sm:$0x1]
        %v1073 = vlaneseq
        %v1074 = vshrl.u32 %v1073, 7
        %v1075 = vsub.s32 0, %v1074
        %v1076 = vrot.slane %v1071, %v1075
        %v1079 = vsel %vm716, %v1067, 0
        %v1082 = vsel %vm720, %v1069, 0
        %1084 = vmatprep.subr.bf16.mxu0 0
        %1085 = vmatpush1.bf16.msra.mxu0 0
        %1086 = vmatprep.subr.bf16.mxu0 0
        %1087 = vmatpush1.bf16.msra.mxu0 0
        %1088 = vmatprep.subr.bf16.mxu0 0
        %1089 = vmatpush1.bf16.msra.mxu0 0
        %1090 = vmatprep.subr.bf16.mxu0 0
        %1091 = vmatpush1.bf16.msra.mxu0 0
        %1092 = vmatprep.subr.bf16.mxu0 0
        %1093 = vmatpush1.bf16.msra.mxu0 0
        %1094 = vmatprep.subr.bf16.mxu0 0
        %1095 = vmatpush1.bf16.msra.mxu0 0
        %1096 = vmatprep.subr.bf16.mxu0 0
        %1097 = vmatpush1.bf16.msra.mxu0 0
        %1098 = vmatprep.subr.bf16.mxu0 0
        %1099 = vmatpush1.bf16.msra.mxu0 %v1082
        %1100 = vmatprep.subr.bf16.mxu0 0
        %1101 = vmatpush2.bf16.msra.mxu0 0
        %1102 = vmatprep.subr.bf16.mxu0 0
        %1103 = vmatpush2.bf16.msra.mxu0 0
        %1104 = vmatprep.subr.bf16.mxu0 0
        %1105 = vmatpush2.bf16.msra.mxu0 0
        %1106 = vmatprep.subr.bf16.mxu0 0
        %1107 = vmatpush2.bf16.msra.mxu0 0
        %1108 = vmatprep.subr.bf16.mxu0 0
        %1109 = vmatpush2.bf16.msra.mxu0 0
        %1110 = vmatprep.subr.bf16.mxu0 0
        %1111 = vmatpush2.bf16.msra.mxu0 0
        %1112 = vmatprep.subr.bf16.mxu0 0
        %1113 = vmatpush2.bf16.msra.mxu0 0
        %1114 = vmatprep.subr.bf16.mxu0 0
        %1115 = vmatpush2.bf16.msra.mxu0 0
        %1116 = vmatprep.mubr.bf16.mxu0 0
        %1117 = vmatmul.mubr.bf16.gmra.mxu0 %v1079
        %v1118 = vpop.f32.mrf.mxu0
        %v1119 = vadd.f32 %v1076, %v1118
        %v1120 = vpop.f32.mrf.mxu0
        %v1121 = vpop.f32.mrf.mxu0
        %v1122 = vpop.f32.mrf.mxu0
        %1123 = vdwg.mxu0
        %v1124 = vmax.f32 %v1119, 0.0
        %v1125 = vpack.c.bf16 %v1124, %v1124
        %s1126 = scalar_lea.vmem [#allocation10], 32
        %v1127 = vld [vmem:[%s1126] sm:$0xf]
        %v1128 = vld [vmem:[%s1126 + $0x4] sm:$0xf]
        %v1129 = vld [vmem:[%s1126 + $0x8] sm:$0xf]
        %v1130 = vld [vmem:[%s1126 + $0xc] sm:$0xf]
        %v1131 = vld [vmem:[%s1126 + $0x10] sm:$0xf]
        %v1132 = vld [vmem:[%s1126 + $0x14] sm:$0xf]
        %v1133 = vld [vmem:[%s1126 + $0x18] sm:$0xf]
        %v1134 = vld [vmem:[%s1126 + $0x1c] sm:$0xf]
        %s1135 = scalar_lea.vmem [#allocation11], 1
        %v1136 = vld [vmem:[%s1135] sm:$0x1]
        %v1138 = vlaneseq
        %v1139 = vshrl.u32 %v1138, 7
        %v1140 = vsub.s32 0, %v1139
        %v1141 = vrot.slane %v1136, %v1140
        %v1151 = vunpack.c.l.b16 %v1127
        %v1152 = vunpack.c.l.b16 %v1128
        %v1153 = vunpack.c.l.b16 %v1129
        %v1154 = vunpack.c.l.b16 %v1130
        %v1155 = vunpack.c.l.b16 %v1131
        %v1156 = vunpack.c.l.b16 %v1132
        %v1157 = vunpack.c.l.b16 %v1133
        %v1158 = vunpack.c.l.b16 %v1134
        %v1159 = vpack.c.b16 %v1152, %v1151
        %v1160 = vpack.c.b16 %v1154, %v1153
        %v1161 = vpack.c.b16 %v1156, %v1155
        %v1162 = vpack.c.b16 %v1158, %v1157
        %v1168 = vsel %vm805, %v1125, 0
        %1170 = vmatprep.subr.bf16.mxu0 0
        %1171 = vmatpush1.bf16.msra.mxu0 0
        %1172 = vmatprep.subr.bf16.mxu0 0
        %1173 = vmatpush1.bf16.msra.mxu0 0
        %1174 = vmatprep.subr.bf16.mxu0 0
        %1175 = vmatpush1.bf16.msra.mxu0 0
        %1176 = vmatprep.subr.bf16.mxu0 0
        %1177 = vmatpush1.bf16.msra.mxu0 0
        %1178 = vmatprep.subr.bf16.mxu0 0
        %1179 = vmatpush1.bf16.msra.mxu0 %v1162
        %1180 = vmatprep.subr.bf16.mxu0 0
        %1181 = vmatpush1.bf16.msra.mxu0 %v1161
        %1182 = vmatprep.subr.bf16.mxu0 0
        %1183 = vmatpush1.bf16.msra.mxu0 %v1160
        %1184 = vmatprep.subr.bf16.mxu0 0
        %1185 = vmatpush1.bf16.msra.mxu0 %v1159
        %1186 = vmatprep.subr.bf16.mxu0 0
        %1187 = vmatpush2.bf16.msra.mxu0 0
        %1188 = vmatprep.subr.bf16.mxu0 0
        %1189 = vmatpush2.bf16.msra.mxu0 0
        %1190 = vmatprep.subr.bf16.mxu0 0
        %1191 = vmatpush2.bf16.msra.mxu0 0
        %1192 = vmatprep.subr.bf16.mxu0 0
        %1193 = vmatpush2.bf16.msra.mxu0 0
        %1194 = vmatprep.subr.bf16.mxu0 0
        %1195 = vmatpush2.bf16.msra.mxu0 0
        %1196 = vmatprep.subr.bf16.mxu0 0
        %1197 = vmatpush2.bf16.msra.mxu0 0
        %1198 = vmatprep.subr.bf16.mxu0 0
        %1199 = vmatpush2.bf16.msra.mxu0 0
        %1200 = vmatprep.subr.bf16.mxu0 0
        %1201 = vmatpush2.bf16.msra.mxu0 0
        %1202 = vmatprep.mubr.bf16.mxu0 0
        %1203 = vmatmul.mubr.bf16.gmra.mxu0 %v1168
        %v1204 = vpop.f32.mrf.mxu0
        %v1205 = vadd.f32 %v1141, %v1204
        %v1206 = vpop.f32.mrf.mxu0
        %v1207 = vpop.f32.mrf.mxu0
        %v1208 = vpop.f32.mrf.mxu0
        %1209 = vdwg.mxu0
        %v1210 = vmax.f32 %v1205, 0.0
        %v1211 = vpack.c.bf16 %v1210, %v1210
        %s1212 = scalar_lea.vmem [#allocation13], 128
        %v1213 = vld [vmem:[%s1212] sm:$0xff]
        %v1214 = vld [vmem:[%s1212 + $0x8] sm:$0xff]
        %v1215 = vld [vmem:[%s1212 + $0x10] sm:$0xff]
        %v1216 = vld [vmem:[%s1212 + $0x18] sm:$0xff]
        %v1217 = vld [vmem:[%s1212 + $0x20] sm:$0xff]
        %v1218 = vld [vmem:[%s1212 + $0x28] sm:$0xff]
        %v1219 = vld [vmem:[%s1212 + $0x30] sm:$0xff]
        %v1220 = vld [vmem:[%s1212 + $0x38] sm:$0xff]
        %v1221 = vld [vmem:[%s1212 + $0x40] sm:$0xff]
        %v1222 = vld [vmem:[%s1212 + $0x48] sm:$0xff]
        %v1223 = vld [vmem:[%s1212 + $0x50] sm:$0xff]
        %v1224 = vld [vmem:[%s1212 + $0x58] sm:$0xff]
        %v1225 = vld [vmem:[%s1212 + $0x60] sm:$0xff]
        %v1226 = vld [vmem:[%s1212 + $0x68] sm:$0xff]
        %v1227 = vld [vmem:[%s1212 + $0x70] sm:$0xff]
        %v1228 = vld [vmem:[%s1212 + $0x78] sm:$0xff]
        %s1229 = scalar_lea.vmem %s10, 4
        %v1230 = vld [vmem:[%s1229] sm:$0xf]
        %v1232 = vlaneseq
        %v1233 = vshrl.u32 %v1232, 7
        %v1234 = vsub.s32 0, %v1233
        %v1235 = vrot.slane %v1230, %v1234
        %v1236 = vlaneseq
        %v1237 = vshrl.u32 %v1236, 7
        %v1238 = vsub.s32 1, %v1237
        %v1239 = vrot.slane %v1230, %v1238
        %v1240 = vlaneseq
        %v1241 = vshrl.u32 %v1240, 7
        %v1242 = vsub.s32 2, %v1241
        %v1243 = vrot.slane %v1230, %v1242
        %v1244 = vlaneseq
        %v1245 = vshrl.u32 %v1244, 7
        %v1246 = vsub.s32 3, %v1245
        %v1247 = vrot.slane %v1230, %v1246
        %v1268 = vunpack.c.l.b16 %v1213
        %v1269 = vunpack.c.h.b16 %v1213
        %v1270 = vunpack.c.l.b16 %v1214
        %v1271 = vunpack.c.h.b16 %v1214
        %v1272 = vunpack.c.l.b16 %v1215
        %v1273 = vunpack.c.h.b16 %v1215
        %v1274 = vunpack.c.l.b16 %v1216
        %v1275 = vunpack.c.h.b16 %v1216
        %v1276 = vunpack.c.l.b16 %v1217
        %v1277 = vunpack.c.h.b16 %v1217
        %v1278 = vunpack.c.l.b16 %v1218
        %v1279 = vunpack.c.h.b16 %v1218
        %v1280 = vunpack.c.l.b16 %v1219
        %v1281 = vunpack.c.h.b16 %v1219
        %v1282 = vunpack.c.l.b16 %v1220
        %v1283 = vunpack.c.h.b16 %v1220
        %v1284 = vunpack.c.l.b16 %v1221
        %v1285 = vunpack.c.h.b16 %v1221
        %v1286 = vunpack.c.l.b16 %v1222
        %v1287 = vunpack.c.h.b16 %v1222
        %v1288 = vunpack.c.l.b16 %v1223
        %v1289 = vunpack.c.h.b16 %v1223
        %v1290 = vunpack.c.l.b16 %v1224
        %v1291 = vunpack.c.h.b16 %v1224
        %v1292 = vunpack.c.l.b16 %v1225
        %v1293 = vunpack.c.h.b16 %v1225
        %v1294 = vunpack.c.l.b16 %v1226
        %v1295 = vunpack.c.h.b16 %v1226
        %v1296 = vunpack.c.l.b16 %v1227
        %v1297 = vunpack.c.h.b16 %v1227
        %v1298 = vunpack.c.l.b16 %v1228
        %v1299 = vunpack.c.h.b16 %v1228
        %v1300 = vpack.c.b16 %v1272, %v1268
        %v1301 = vpack.c.b16 %v1273, %v1269
        %v1302 = vpack.c.b16 %v1274, %v1270
        %v1303 = vpack.c.b16 %v1275, %v1271
        %v1304 = vpack.c.b16 %v1280, %v1276
        %v1305 = vpack.c.b16 %v1281, %v1277
        %v1306 = vpack.c.b16 %v1282, %v1278
        %v1307 = vpack.c.b16 %v1283, %v1279
        %v1308 = vpack.c.b16 %v1288, %v1284
        %v1309 = vpack.c.b16 %v1289, %v1285
        %v1310 = vpack.c.b16 %v1290, %v1286
        %v1311 = vpack.c.b16 %v1291, %v1287
        %v1312 = vpack.c.b16 %v1296, %v1292
        %v1313 = vpack.c.b16 %v1297, %v1293
        %v1314 = vpack.c.b16 %v1298, %v1294
        %v1315 = vpack.c.b16 %v1299, %v1295
        %v1333 = vsel %vm805, %v1211, 0
        %1335 = vmatprep.subr.bf16.mxu0 0
        %1336 = vmatpush1.bf16.msra.mxu0 0
        %1337 = vmatprep.subr.bf16.mxu0 0
        %1338 = vmatpush1.bf16.msra.mxu0 0
        %1339 = vmatprep.subr.bf16.mxu0 0
        %1340 = vmatpush1.bf16.msra.mxu0 0
        %1341 = vmatprep.subr.bf16.mxu0 0
        %1342 = vmatpush1.bf16.msra.mxu0 0
        %1343 = vmatprep.subr.bf16.mxu0 %v1313
        %1344 = vmatpush1.bf16.msra.mxu0 %v1312
        %1345 = vmatprep.subr.bf16.mxu0 %v1309
        %1346 = vmatpush1.bf16.msra.mxu0 %v1308
        %1347 = vmatprep.subr.bf16.mxu0 %v1305
        %1348 = vmatpush1.bf16.msra.mxu0 %v1304
        %1349 = vmatprep.subr.bf16.mxu0 %v1301
        %1350 = vmatpush1.bf16.msra.mxu0 %v1300
        %1351 = vmatprep.subr.bf16.mxu0 0
        %1352 = vmatpush2.bf16.msra.mxu0 0
        %1353 = vmatprep.subr.bf16.mxu0 0
        %1354 = vmatpush2.bf16.msra.mxu0 0
        %1355 = vmatprep.subr.bf16.mxu0 0
        %1356 = vmatpush2.bf16.msra.mxu0 0
        %1357 = vmatprep.subr.bf16.mxu0 0
        %1358 = vmatpush2.bf16.msra.mxu0 0
        %1359 = vmatprep.subr.bf16.mxu0 0
        %1360 = vmatpush2.bf16.msra.mxu0 0
        %1361 = vmatprep.subr.bf16.mxu0 0
        %1362 = vmatpush2.bf16.msra.mxu0 0
        %1363 = vmatprep.subr.bf16.mxu0 0
        %1364 = vmatpush2.bf16.msra.mxu0 0
        %1365 = vmatprep.subr.bf16.mxu0 0
        %1366 = vmatpush2.bf16.msra.mxu0 0
        %1367 = vmatprep.mubr.bf16.mxu0 0
        %1368 = vmatmul.mubr.bf16.gmra.mxu0 %v1333
        %v1369 = vpop.f32.mrf.mxu0
        %v1370 = vadd.f32 %v1235, %v1369
        %v1371 = vpop.f32.mrf.mxu0
        %v1372 = vadd.f32 %v1239, %v1371
        %v1373 = vpop.f32.mrf.mxu0
        %v1374 = vpop.f32.mrf.mxu0
        %1375 = vdwg.mxu0
        %1376 = vmatprep.subr.bf16.mxu0 0
        %1377 = vmatpush1.bf16.msra.mxu0 0
        %1378 = vmatprep.subr.bf16.mxu0 0
        %1379 = vmatpush1.bf16.msra.mxu0 0
        %1380 = vmatprep.subr.bf16.mxu0 0
        %1381 = vmatpush1.bf16.msra.mxu0 0
        %1382 = vmatprep.subr.bf16.mxu0 0
        %1383 = vmatpush1.bf16.msra.mxu0 0
        %1384 = vmatprep.subr.bf16.mxu0 %v1315
        %1385 = vmatpush1.bf16.msra.mxu0 %v1314
        %1386 = vmatprep.subr.bf16.mxu0 %v1311
        %1387 = vmatpush1.bf16.msra.mxu0 %v1310
        %1388 = vmatprep.subr.bf16.mxu0 %v1307
        %1389 = vmatpush1.bf16.msra.mxu0 %v1306
        %1390 = vmatprep.subr.bf16.mxu0 %v1303
        %1391 = vmatpush1.bf16.msra.mxu0 %v1302
        %1392 = vmatprep.subr.bf16.mxu0 0
        %1393 = vmatpush2.bf16.msra.mxu0 0
        %1394 = vmatprep.subr.bf16.mxu0 0
        %1395 = vmatpush2.bf16.msra.mxu0 0
        %1396 = vmatprep.subr.bf16.mxu0 0
        %1397 = vmatpush2.bf16.msra.mxu0 0
        %1398 = vmatprep.subr.bf16.mxu0 0
        %1399 = vmatpush2.bf16.msra.mxu0 0
        %1400 = vmatprep.subr.bf16.mxu0 0
        %1401 = vmatpush2.bf16.msra.mxu0 0
        %1402 = vmatprep.subr.bf16.mxu0 0
        %1403 = vmatpush2.bf16.msra.mxu0 0
        %1404 = vmatprep.subr.bf16.mxu0 0
        %1405 = vmatpush2.bf16.msra.mxu0 0
        %1406 = vmatprep.subr.bf16.mxu0 0
        %1407 = vmatpush2.bf16.msra.mxu0 0
        %1408 = vmatprep.mubr.bf16.mxu0 0
        %1409 = vmatmul.mubr.bf16.gmra.mxu0 %v1333
        %v1410 = vpop.f32.mrf.mxu0
        %v1411 = vadd.f32 %v1243, %v1410
        %v1412 = vpop.f32.mrf.mxu0
        %v1413 = vadd.f32 %v1247, %v1412
        %v1414 = vpop.f32.mrf.mxu0
        %v1415 = vpop.f32.mrf.mxu0
        %1416 = vdwg.mxu0
        %v1417 = vmul.f32 %v1370, %v537
        %v1418 = vsel %vm547, %v1417, 0.0
        %1419 = vadd.xlane.f32.xlu0 %v1418
        %v1420 = vpop.xlane.xlu0 %1419
        %v1421 = vadd.f32 %v1420, %v1372
        %1423 = vset.pattern.permute.xlu0 0
        %1424 = vperm.xlu0 %1423, %v1421
        %v1425 = vpop.permute.xlu0 %1424
        %v1427 = vmul.f32 %v1411, %v1425
        %v1428 = vadd.f32 %v1427, %v1413
        %v1429 = vadd.f32 %v1066, %v1428
        %v1430 = vpack.c.bf16 %v1429, %v1429
        %s1431 = scalar_lea.vmem [#allocation7], 4
        %v1432 = vld [vmem:[%s1431] sm:$0x3]
        %s1433 = scalar_lea.vmem [#allocation8], 2
        %v1434 = vld [vmem:[%s1433] sm:$0x1]
        %v1436 = vlaneseq
        %v1437 = vshrl.u32 %v1436, 7
        %v1438 = vsub.s32 0, %v1437
        %v1439 = vrot.slane %v1434, %v1438
        %v1442 = vsel %vm716, %v1430, 0
        %v1445 = vsel %vm720, %v1432, 0
        %1447 = vmatprep.subr.bf16.mxu0 0
        %1448 = vmatpush1.bf16.msra.mxu0 0
        %1449 = vmatprep.subr.bf16.mxu0 0
        %1450 = vmatpush1.bf16.msra.mxu0 0
        %1451 = vmatprep.subr.bf16.mxu0 0
        %1452 = vmatpush1.bf16.msra.mxu0 0
        %1453 = vmatprep.subr.bf16.mxu0 0
        %1454 = vmatpush1.bf16.msra.mxu0 0
        %1455 = vmatprep.subr.bf16.mxu0 0
        %1456 = vmatpush1.bf16.msra.mxu0 0
        %1457 = vmatprep.subr.bf16.mxu0 0
        %1458 = vmatpush1.bf16.msra.mxu0 0
        %1459 = vmatprep.subr.bf16.mxu0 0
        %1460 = vmatpush1.bf16.msra.mxu0 0
        %1461 = vmatprep.subr.bf16.mxu0 0
        %1462 = vmatpush1.bf16.msra.mxu0 %v1445
        %1463 = vmatprep.subr.bf16.mxu0 0
        %1464 = vmatpush2.bf16.msra.mxu0 0
        %1465 = vmatprep.subr.bf16.mxu0 0
        %1466 = vmatpush2.bf16.msra.mxu0 0
        %1467 = vmatprep.subr.bf16.mxu0 0
        %1468 = vmatpush2.bf16.msra.mxu0 0
        %1469 = vmatprep.subr.bf16.mxu0 0
        %1470 = vmatpush2.bf16.msra.mxu0 0
        %1471 = vmatprep.subr.bf16.mxu0 0
        %1472 = vmatpush2.bf16.msra.mxu0 0
        %1473 = vmatprep.subr.bf16.mxu0 0
        %1474 = vmatpush2.bf16.msra.mxu0 0
        %1475 = vmatprep.subr.bf16.mxu0 0
        %1476 = vmatpush2.bf16.msra.mxu0 0
        %1477 = vmatprep.subr.bf16.mxu0 0
        %1478 = vmatpush2.bf16.msra.mxu0 0
        %1479 = vmatprep.mubr.bf16.mxu0 0
        %1480 = vmatmul.mubr.bf16.gmra.mxu0 %v1442
        %v1481 = vpop.f32.mrf.mxu0
        %v1482 = vadd.f32 %v1439, %v1481
        %v1483 = vpop.f32.mrf.mxu0
        %v1484 = vpop.f32.mrf.mxu0
        %v1485 = vpop.f32.mrf.mxu0
        %1486 = vdwg.mxu0
        %v1487 = vmax.f32 %v1482, 0.0
        %v1488 = vpack.c.bf16 %v1487, %v1487
        %s1489 = scalar_lea.vmem [#allocation10], 64
        %v1490 = vld [vmem:[%s1489] sm:$0xf]
        %v1491 = vld [vmem:[%s1489 + $0x4] sm:$0xf]
        %v1492 = vld [vmem:[%s1489 + $0x8] sm:$0xf]
        %v1493 = vld [vmem:[%s1489 + $0xc] sm:$0xf]
        %v1494 = vld [vmem:[%s1489 + $0x10] sm:$0xf]
        %v1495 = vld [vmem:[%s1489 + $0x14] sm:$0xf]
        %v1496 = vld [vmem:[%s1489 + $0x18] sm:$0xf]
        %v1497 = vld [vmem:[%s1489 + $0x1c] sm:$0xf]
        %s1498 = scalar_lea.vmem [#allocation11], 2
        %v1499 = vld [vmem:[%s1498] sm:$0x1]
        %v1501 = vlaneseq
        %v1502 = vshrl.u32 %v1501, 7
        %v1503 = vsub.s32 0, %v1502
        %v1504 = vrot.slane %v1499, %v1503
        %v1514 = vunpack.c.l.b16 %v1490
        %v1515 = vunpack.c.l.b16 %v1491
        %v1516 = vunpack.c.l.b16 %v1492
        %v1517 = vunpack.c.l.b16 %v1493
        %v1518 = vunpack.c.l.b16 %v1494
        %v1519 = vunpack.c.l.b16 %v1495
        %v1520 = vunpack.c.l.b16 %v1496
        %v1521 = vunpack.c.l.b16 %v1497
        %v1522 = vpack.c.b16 %v1515, %v1514
        %v1523 = vpack.c.b16 %v1517, %v1516
        %v1524 = vpack.c.b16 %v1519, %v1518
        %v1525 = vpack.c.b16 %v1521, %v1520
        %v1531 = vsel %vm805, %v1488, 0
        %1533 = vmatprep.subr.bf16.mxu0 0
        %1534 = vmatpush1.bf16.msra.mxu0 0
        %1535 = vmatprep.subr.bf16.mxu0 0
        %1536 = vmatpush1.bf16.msra.mxu0 0
        %1537 = vmatprep.subr.bf16.mxu0 0
        %1538 = vmatpush1.bf16.msra.mxu0 0
        %1539 = vmatprep.subr.bf16.mxu0 0
        %1540 = vmatpush1.bf16.msra.mxu0 0
        %1541 = vmatprep.subr.bf16.mxu0 0
        %1542 = vmatpush1.bf16.msra.mxu0 %v1525
        %1543 = vmatprep.subr.bf16.mxu0 0
        %1544 = vmatpush1.bf16.msra.mxu0 %v1524
        %1545 = vmatprep.subr.bf16.mxu0 0
        %1546 = vmatpush1.bf16.msra.mxu0 %v1523
        %1547 = vmatprep.subr.bf16.mxu0 0
        %1548 = vmatpush1.bf16.msra.mxu0 %v1522
        %1549 = vmatprep.subr.bf16.mxu0 0
        %1550 = vmatpush2.bf16.msra.mxu0 0
        %1551 = vmatprep.subr.bf16.mxu0 0
        %1552 = vmatpush2.bf16.msra.mxu0 0
        %1553 = vmatprep.subr.bf16.mxu0 0
        %1554 = vmatpush2.bf16.msra.mxu0 0
        %1555 = vmatprep.subr.bf16.mxu0 0
        %1556 = vmatpush2.bf16.msra.mxu0 0
        %1557 = vmatprep.subr.bf16.mxu0 0
        %1558 = vmatpush2.bf16.msra.mxu0 0
        %1559 = vmatprep.subr.bf16.mxu0 0
        %1560 = vmatpush2.bf16.msra.mxu0 0
        %1561 = vmatprep.subr.bf16.mxu0 0
        %1562 = vmatpush2.bf16.msra.mxu0 0
        %1563 = vmatprep.subr.bf16.mxu0 0
        %1564 = vmatpush2.bf16.msra.mxu0 0
        %1565 = vmatprep.mubr.bf16.mxu0 0
        %1566 = vmatmul.mubr.bf16.gmra.mxu0 %v1531
        %v1567 = vpop.f32.mrf.mxu0
        %v1568 = vadd.f32 %v1504, %v1567
        %v1569 = vpop.f32.mrf.mxu0
        %v1570 = vpop.f32.mrf.mxu0
        %v1571 = vpop.f32.mrf.mxu0
        %1572 = vdwg.mxu0
        %v1573 = vmax.f32 %v1568, 0.0
        %v1574 = vpack.c.bf16 %v1573, %v1573
        %s1575 = scalar_lea.vmem [#allocation13], 256
        %v1576 = vld [vmem:[%s1575] sm:$0xff]
        %v1577 = vld [vmem:[%s1575 + $0x8] sm:$0xff]
        %v1578 = vld [vmem:[%s1575 + $0x10] sm:$0xff]
        %v1579 = vld [vmem:[%s1575 + $0x18] sm:$0xff]
        %v1580 = vld [vmem:[%s1575 + $0x20] sm:$0xff]
        %v1581 = vld [vmem:[%s1575 + $0x28] sm:$0xff]
        %v1582 = vld [vmem:[%s1575 + $0x30] sm:$0xff]
        %v1583 = vld [vmem:[%s1575 + $0x38] sm:$0xff]
        %v1584 = vld [vmem:[%s1575 + $0x40] sm:$0xff]
        %v1585 = vld [vmem:[%s1575 + $0x48] sm:$0xff]
        %v1586 = vld [vmem:[%s1575 + $0x50] sm:$0xff]
        %v1587 = vld [vmem:[%s1575 + $0x58] sm:$0xff]
        %v1588 = vld [vmem:[%s1575 + $0x60] sm:$0xff]
        %v1589 = vld [vmem:[%s1575 + $0x68] sm:$0xff]
        %v1590 = vld [vmem:[%s1575 + $0x70] sm:$0xff]
        %v1591 = vld [vmem:[%s1575 + $0x78] sm:$0xff]
        %s1592 = scalar_lea.vmem %s10, 8
        %v1593 = vld [vmem:[%s1592] sm:$0xf]
        %v1595 = vlaneseq
        %v1596 = vshrl.u32 %v1595, 7
        %v1597 = vsub.s32 0, %v1596
        %v1598 = vrot.slane %v1593, %v1597
        %v1599 = vlaneseq
        %v1600 = vshrl.u32 %v1599, 7
        %v1601 = vsub.s32 1, %v1600
        %v1602 = vrot.slane %v1593, %v1601
        %v1603 = vlaneseq
        %v1604 = vshrl.u32 %v1603, 7
        %v1605 = vsub.s32 2, %v1604
        %v1606 = vrot.slane %v1593, %v1605
        %v1607 = vlaneseq
        %v1608 = vshrl.u32 %v1607, 7
        %v1609 = vsub.s32 3, %v1608
        %v1610 = vrot.slane %v1593, %v1609
        %v1631 = vunpack.c.l.b16 %v1576
        %v1632 = vunpack.c.h.b16 %v1576
        %v1633 = vunpack.c.l.b16 %v1577
        %v1634 = vunpack.c.h.b16 %v1577
        %v1635 = vunpack.c.l.b16 %v1578
        %v1636 = vunpack.c.h.b16 %v1578
        %v1637 = vunpack.c.l.b16 %v1579
        %v1638 = vunpack.c.h.b16 %v1579
        %v1639 = vunpack.c.l.b16 %v1580
        %v1640 = vunpack.c.h.b16 %v1580
        %v1641 = vunpack.c.l.b16 %v1581
        %v1642 = vunpack.c.h.b16 %v1581
        %v1643 = vunpack.c.l.b16 %v1582
        %v1644 = vunpack.c.h.b16 %v1582
        %v1645 = vunpack.c.l.b16 %v1583
        %v1646 = vunpack.c.h.b16 %v1583
        %v1647 = vunpack.c.l.b16 %v1584
        %v1648 = vunpack.c.h.b16 %v1584
        %v1649 = vunpack.c.l.b16 %v1585
        %v1650 = vunpack.c.h.b16 %v1585
        %v1651 = vunpack.c.l.b16 %v1586
        %v1652 = vunpack.c.h.b16 %v1586
        %v1653 = vunpack.c.l.b16 %v1587
        %v1654 = vunpack.c.h.b16 %v1587
        %v1655 = vunpack.c.l.b16 %v1588
        %v1656 = vunpack.c.h.b16 %v1588
        %v1657 = vunpack.c.l.b16 %v1589
        %v1658 = vunpack.c.h.b16 %v1589
        %v1659 = vunpack.c.l.b16 %v1590
        %v1660 = vunpack.c.h.b16 %v1590
        %v1661 = vunpack.c.l.b16 %v1591
        %v1662 = vunpack.c.h.b16 %v1591
        %v1663 = vpack.c.b16 %v1635, %v1631
        %v1664 = vpack.c.b16 %v1636, %v1632
        %v1665 = vpack.c.b16 %v1637, %v1633
        %v1666 = vpack.c.b16 %v1638, %v1634
        %v1667 = vpack.c.b16 %v1643, %v1639
        %v1668 = vpack.c.b16 %v1644, %v1640
        %v1669 = vpack.c.b16 %v1645, %v1641
        %v1670 = vpack.c.b16 %v1646, %v1642
        %v1671 = vpack.c.b16 %v1651, %v1647
        %v1672 = vpack.c.b16 %v1652, %v1648
        %v1673 = vpack.c.b16 %v1653, %v1649
        %v1674 = vpack.c.b16 %v1654, %v1650
        %v1675 = vpack.c.b16 %v1659, %v1655
        %v1676 = vpack.c.b16 %v1660, %v1656
        %v1677 = vpack.c.b16 %v1661, %v1657
        %v1678 = vpack.c.b16 %v1662, %v1658
        %v1696 = vsel %vm805, %v1574, 0
        %1698 = vmatprep.subr.bf16.mxu0 0
        %1699 = vmatpush1.bf16.msra.mxu0 0
        %1700 = vmatprep.subr.bf16.mxu0 0
        %1701 = vmatpush1.bf16.msra.mxu0 0
        %1702 = vmatprep.subr.bf16.mxu0 0
        %1703 = vmatpush1.bf16.msra.mxu0 0
        %1704 = vmatprep.subr.bf16.mxu0 0
        %1705 = vmatpush1.bf16.msra.mxu0 0
        %1706 = vmatprep.subr.bf16.mxu0 %v1676
        %1707 = vmatpush1.bf16.msra.mxu0 %v1675
        %1708 = vmatprep.subr.bf16.mxu0 %v1672
        %1709 = vmatpush1.bf16.msra.mxu0 %v1671
        %1710 = vmatprep.subr.bf16.mxu0 %v1668
        %1711 = vmatpush1.bf16.msra.mxu0 %v1667
        %1712 = vmatprep.subr.bf16.mxu0 %v1664
        %1713 = vmatpush1.bf16.msra.mxu0 %v1663
        %1714 = vmatprep.subr.bf16.mxu0 0
        %1715 = vmatpush2.bf16.msra.mxu0 0
        %1716 = vmatprep.subr.bf16.mxu0 0
        %1717 = vmatpush2.bf16.msra.mxu0 0
        %1718 = vmatprep.subr.bf16.mxu0 0
        %1719 = vmatpush2.bf16.msra.mxu0 0
        %1720 = vmatprep.subr.bf16.mxu0 0
        %1721 = vmatpush2.bf16.msra.mxu0 0
        %1722 = vmatprep.subr.bf16.mxu0 0
        %1723 = vmatpush2.bf16.msra.mxu0 0
        %1724 = vmatprep.subr.bf16.mxu0 0
        %1725 = vmatpush2.bf16.msra.mxu0 0
        %1726 = vmatprep.subr.bf16.mxu0 0
        %1727 = vmatpush2.bf16.msra.mxu0 0
        %1728 = vmatprep.subr.bf16.mxu0 0
        %1729 = vmatpush2.bf16.msra.mxu0 0
        %1730 = vmatprep.mubr.bf16.mxu0 0
        %1731 = vmatmul.mubr.bf16.gmra.mxu0 %v1696
        %v1732 = vpop.f32.mrf.mxu0
        %v1733 = vadd.f32 %v1598, %v1732
        %v1734 = vpop.f32.mrf.mxu0
        %v1735 = vadd.f32 %v1602, %v1734
        %v1736 = vpop.f32.mrf.mxu0
        %v1737 = vpop.f32.mrf.mxu0
        %1738 = vdwg.mxu0
        %1739 = vmatprep.subr.bf16.mxu0 0
        %1740 = vmatpush1.bf16.msra.mxu0 0
        %1741 = vmatprep.subr.bf16.mxu0 0
        %1742 = vmatpush1.bf16.msra.mxu0 0
        %1743 = vmatprep.subr.bf16.mxu0 0
        %1744 = vmatpush1.bf16.msra.mxu0 0
        %1745 = vmatprep.subr.bf16.mxu0 0
        %1746 = vmatpush1.bf16.msra.mxu0 0
        %1747 = vmatprep.subr.bf16.mxu0 %v1678
        %1748 = vmatpush1.bf16.msra.mxu0 %v1677
        %1749 = vmatprep.subr.bf16.mxu0 %v1674
        %1750 = vmatpush1.bf16.msra.mxu0 %v1673
        %1751 = vmatprep.subr.bf16.mxu0 %v1670
        %1752 = vmatpush1.bf16.msra.mxu0 %v1669
        %1753 = vmatprep.subr.bf16.mxu0 %v1666
        %1754 = vmatpush1.bf16.msra.mxu0 %v1665
        %1755 = vmatprep.subr.bf16.mxu0 0
        %1756 = vmatpush2.bf16.msra.mxu0 0
        %1757 = vmatprep.subr.bf16.mxu0 0
        %1758 = vmatpush2.bf16.msra.mxu0 0
        %1759 = vmatprep.subr.bf16.mxu0 0
        %1760 = vmatpush2.bf16.msra.mxu0 0
        %1761 = vmatprep.subr.bf16.mxu0 0
        %1762 = vmatpush2.bf16.msra.mxu0 0
        %1763 = vmatprep.subr.bf16.mxu0 0
        %1764 = vmatpush2.bf16.msra.mxu0 0
        %1765 = vmatprep.subr.bf16.mxu0 0
        %1766 = vmatpush2.bf16.msra.mxu0 0
        %1767 = vmatprep.subr.bf16.mxu0 0
        %1768 = vmatpush2.bf16.msra.mxu0 0
        %1769 = vmatprep.subr.bf16.mxu0 0
        %1770 = vmatpush2.bf16.msra.mxu0 0
        %1771 = vmatprep.mubr.bf16.mxu0 0
        %1772 = vmatmul.mubr.bf16.gmra.mxu0 %v1696
        %v1773 = vpop.f32.mrf.mxu0
        %v1774 = vadd.f32 %v1606, %v1773
        %v1775 = vpop.f32.mrf.mxu0
        %v1776 = vadd.f32 %v1610, %v1775
        %v1777 = vpop.f32.mrf.mxu0
        %v1778 = vpop.f32.mrf.mxu0
        %1779 = vdwg.mxu0
        %v1780 = vmul.f32 %v1733, %v537
        %v1781 = vsel %vm547, %v1780, 0.0
        %1782 = vadd.xlane.f32.xlu0 %v1781
        %v1783 = vpop.xlane.xlu0 %1782
        %v1784 = vadd.f32 %v1783, %v1735
        %1786 = vset.pattern.permute.xlu0 0
        %1787 = vperm.xlu0 %1786, %v1784
        %v1788 = vpop.permute.xlu0 %1787
        %v1790 = vmul.f32 %v1774, %v1788
        %v1791 = vadd.f32 %v1790, %v1776
        %v1792 = vadd.f32 %v1429, %v1791
        %v1793 = vld [vmem:[%s11] sm:$0xf]
        %v1794 = vld [vmem:[%s12] sm:$0x1]
        %v1796 = vlaneseq
        %v1797 = vshrl.u32 %v1796, 7
        %v1798 = vsub.s32 0, %v1797
        %v1799 = vrot.slane %v1794, %v1798
        %v1802 = vsel %vm716, %v1792, 0
        %vm1804 = vcmask 1043456
        %v1806 = vsel %vm1804, %v1793, 0
        %1808 = vmatprep.subr.mxu0 0.0
        %1809 = vmatpush1.msra.mxu0 0.0
        %1810 = vmatprep.subr.mxu0 0.0
        %1811 = vmatpush1.msra.mxu0 0.0
        %1812 = vmatprep.subr.mxu0 0.0
        %1813 = vmatpush1.msra.mxu0 0.0
        %1814 = vmatprep.subr.mxu0 0.0
        %1815 = vmatpush1.msra.mxu0 0.0
        %1816 = vmatprep.subr.mxu0 0.0
        %1817 = vmatpush1.msra.mxu0 0.0
        %1818 = vmatprep.subr.mxu0 0.0
        %1819 = vmatpush1.msra.mxu0 0.0
        %1820 = vmatprep.subr.mxu0 0.0
        %1821 = vmatpush1.msra.mxu0 0.0
        %1822 = vmatprep.subr.mxu0 0.0
        %1823 = vmatpush1.msra.mxu0 0.0
        %1824 = vmatprep.subr.mxu0 0.0
        %1825 = vmatpush1.msra.mxu0 0.0
        %1826 = vmatprep.subr.mxu0 0.0
        %1827 = vmatpush1.msra.mxu0 0.0
        %1828 = vmatprep.subr.mxu0 0.0
        %1829 = vmatpush1.msra.mxu0 0.0
        %1830 = vmatprep.subr.mxu0 0.0
        %1831 = vmatpush1.msra.mxu0 0.0
        %1832 = vmatprep.subr.mxu0 0.0
        %1833 = vmatpush1.msra.mxu0 0.0
        %1834 = vmatprep.subr.mxu0 0.0
        %1835 = vmatpush1.msra.mxu0 0.0
        %1836 = vmatprep.subr.mxu0 0.0
        %1837 = vmatpush1.msra.mxu0 0.0
        %1838 = vmatprep.subr.mxu0 0.0
        %1839 = vmatpush1.msra.mxu0 %v1806
        %1840 = vmatprep.subr.mxu0 0.0
        %1841 = vmatpush2.msra.mxu0 0.0
        %1842 = vmatprep.subr.mxu0 0.0
        %1843 = vmatpush2.msra.mxu0 0.0
        %1844 = vmatprep.subr.mxu0 0.0
        %1845 = vmatpush2.msra.mxu0 0.0
        %1846 = vmatprep.subr.mxu0 0.0
        %1847 = vmatpush2.msra.mxu0 0.0
        %1848 = vmatprep.subr.mxu0 0.0
        %1849 = vmatpush2.msra.mxu0 0.0
        %1850 = vmatprep.subr.mxu0 0.0
        %1851 = vmatpush2.msra.mxu0 0.0
        %1852 = vmatprep.subr.mxu0 0.0
        %1853 = vmatpush2.msra.mxu0 0.0
        %1854 = vmatprep.subr.mxu0 0.0
        %1855 = vmatpush2.msra.mxu0 0.0
        %1856 = vmatprep.subr.mxu0 0.0
        %1857 = vmatpush2.msra.mxu0 0.0
        %1858 = vmatprep.subr.mxu0 0.0
        %1859 = vmatpush2.msra.mxu0 0.0
        %1860 = vmatprep.subr.mxu0 0.0
        %1861 = vmatpush2.msra.mxu0 0.0
        %1862 = vmatprep.subr.mxu0 0.0
        %1863 = vmatpush2.msra.mxu0 0.0
        %1864 = vmatprep.subr.mxu0 0.0
        %1865 = vmatpush2.msra.mxu0 0.0
        %1866 = vmatprep.subr.mxu0 0.0
        %1867 = vmatpush2.msra.mxu0 0.0
        %1868 = vmatprep.subr.mxu0 0.0
        %1869 = vmatpush2.msra.mxu0 0.0
        %1870 = vmatprep.subr.mxu0 0.0
        %1871 = vmatpush2.msra.mxu0 0.0
        %1872 = vmatprep.mubr.f32.mxu0 0.0
        %1873 = vmatmul.mubr.f32.gmra.mxu0 %v1802
        %v1874 = vpop.f32.mrf.mxu0
        %v1875 = vadd.f32 %v1799, %v1874
        %v1876 = vpop.f32.mrf.mxu0
        %1877 = vdwg.mxu0
        %1878 = vst.msk [vmem:[%s535] sm:$0xff] %vm716, %v1875
        %p1879 = scmp.lt.s32.totalorder %s30, 1
        %s1880 = scalar_select %p1879, %s30, 1
        %s1881 = smul.addr %s1880, 8
        %s1882 = scalar_lea.vmem %s13, %s1881
        // Predicated region
        $region101: #{tpu_custom_call.1} parent=71 // pred_check
          %p1883 = pneg %p326
        $region102: #{tpu_custom_call.1} parent=71 // pred_check_branch
          %1885 = sbr.rel (%p1883) target = $region104
        $region103: #{tpu_custom_call.1} parent=71 // pred_region
          _
        $region104: #{tpu_custom_call.1} parent=71 // pred_fallthru
          _
      $region72: #{tpu_custom_call.1} parent=5 // pred_fallthru
        _
      %p1886 = scmp.le.s32.totalorder 2, %s25
      // Predicated region
      $region105: #{tpu_custom_call.1} parent=5 // pred_check
        %p1887 = pneg %p1886
      $region106: #{tpu_custom_call.1} parent=5 // pred_check_branch
        %1889 = sbr.rel (%p1887) target = $region108
      $region107: #{tpu_custom_call.1} parent=5 // pred_region
        %s1890 = ssub.s32 %s25, 2
        // Predicated region
        $region109: #{tpu_custom_call.1} parent=107 // pred_check
          %p1891 = pneg %p332
        $region110: #{tpu_custom_call.1} parent=107 // pred_check_branch
          %1893 = sbr.rel (%p1891) target = $region112
        $region111: #{tpu_custom_call.1} parent=107 // pred_region
          %p1894 = scmp.lt.s32.totalorder %s31, 1
          %s1895 = scalar_select %p1894, %s31, 1
          %s1896 = smul.addr %s1895, 8
          %s1897 = scalar_lea.vmem %s13, %s1896
        $region112: #{tpu_custom_call.1} parent=107 // pred_fallthru
          _
      $region108: #{tpu_custom_call.1} parent=5 // pred_fallthru
        _
    $region6: #{tpu_custom_call.1} parent=1 // loop_footer
      %s29 = sadd.s32 1, %s25
    $region7: #{tpu_custom_call.1} parent=1 // loop_footer_branch
      %24 = sbr.rel target = $region3
    $region8: #{tpu_custom_call.1} parent=1 // loop_exit
      _
    %1898 = vsyncpa [#allocation4], 1
    %s1899 = scalar_lea.sflag [#allocation4], 1
    %1900 = vsyncpa %s1899, 1
    %1901 = vsyncpa [#allocation6], 1
    %1902 = vsyncpa [#allocation9], 1
    %1903 = vsyncpa [#allocation12], 1

</llo_original>
